<compile_context>
chip_gen: v5e
topology: v5e:2x2
jax: 0.10.0
libtpu: 0.0.40
codegen_flags: <defaults>
</compile_context>

<pallas_src>
import functools

import jax
import jax.numpy as jnp
from jax.experimental import pallas as pl
from jax.experimental.pallas import tpu as pltpu


def _choose_tiles(batch, num_pts):
    """Pick (bt, b_pad, nt, n_pad): batch / point tiles per grid step."""
    if num_pts <= 2048:                       # whole point dim in one tile
        nt, n_pad = num_pts, num_pts
    else:                                     # tile points; 512 keeps layer-5 act ~2 MiB f32
        nt = 512
        n_pad = pl.cdiv(num_pts, nt) * nt
    # batch elements per grid step: amortize per-step overhead when tiles are small
    bt = min(batch, 8, max(1, 256 // nt))
    b_pad = pl.cdiv(batch, bt) * bt
    return bt, b_pad, nt, n_pad


def mlp_rev_pooled_kernel(x_ref,
                          w1, b1, w2, b2, w3, b3, w4, b4, w5, b5,
                          out_ref, acc_ref, *, bt):
    ni = pl.program_id(1)

    @pl.when(ni == 0)
    def _init():
        # Zero is a valid identity for the running max: every pooled value is a
        # ReLU output and therefore >= 0.
        acc_ref[...] = jnp.zeros_like(acc_ref)

    w1f = w1[...]                              # (3, 64)  f32
    b1f = b1[...]                              # (1, 64)  f32
    for b in range(bt):                        # static unroll, bt <= 8
        xb = x_ref[b]                          # (nt, 3)  f32
        # Layer 1 (Cin=3): three VPU FMAs instead of a padded 3-deep MXU contraction.
        h = (xb[:, 0:1] * w1f[0:1, :]
             + xb[:, 1:2] * w1f[1:2, :]
             + xb[:, 2:3] * w1f[2:3, :])
        h = jnp.maximum(h + b1f, 0.0)          # (nt, 64) f32

        # Layers 2-5: bf16 MXU matmuls, f32 accumulation; BN scale pre-folded into w.
        for w_ref, bias_ref in ((w2, b2), (w3, b3), (w4, b4), (w5, b5)):
            h = jnp.dot(h.astype(w_ref.dtype), w_ref[...],
                        preferred_element_type=jnp.float32)
            h = jnp.maximum(h + bias_ref[...], 0.0)

        # Running max over this point tile (MaxPool1d(num_pts) piecewise).
        tile_max = jnp.max(h, axis=0, keepdims=True)           # (1, 1024)
        acc_ref[pl.ds(b, 1), :] = jnp.maximum(acc_ref[pl.ds(b, 1), :], tile_max)

    @pl.when(ni == pl.num_programs(1) - 1)
    def _finalize():
        out_ref[...] = acc_ref[...]            # single lane-dense (bt, 1024) store


def mlp_rev_forward(x_ncw, params):
    """x_ncw: (B, 3, num_pts) float32, PyTorch NCW layout."""
    B, cin, N = x_ncw.shape
    assert cin == 3
    (w1, b1), (w2, b2), (w3, b3), (w4, b4), (w5, b5), (w6, b6) = params
    bt, b_pad, nt, n_pad = _choose_tiles(B, N)

    # Points-major, channels-last: Conv1d(kernel_size=1) becomes (N, Cin) @ (Cin, Cout).
    # TODO(synk): could feed NCW blocks directly and contract the 3-axis in-kernel to
    #             save this HBM pass; x is only 3 channels wide so the cost is tiny.
    x = jnp.transpose(x_ncw, (0, 2, 1)).astype(jnp.float32)     # (B, N, 3)
    if n_pad != N:
        # Duplicate the last real point: duplicates cannot change the max.
        x = jnp.pad(x, ((0, 0), (0, n_pad - N), (0, 0)), mode="edge")
    if b_pad != B:
        x = jnp.pad(x, ((0, b_pad - B), (0, 0), (0, 0)))

    grid = (b_pad // bt, n_pad // nt)
    feat = w5.shape[1]                                          # 1024

    def _full(arr):                                             # whole-array block, constant index
        return pl.BlockSpec(arr.shape, lambda bi, ni: (0,) * arr.ndim)

    weights = [w1, b1, w2, b2, w3, b3, w4, b4, w5, b5]
    in_specs = [pl.BlockSpec((bt, nt, 3), lambda bi, ni: (bi, ni, 0))]
    in_specs += [_full(a) for a in weights]

    flops = 2 * B * N * (3 * 64 + 64 * 64 + 64 * 64 + 64 * 128 + 128 * 1024)
    bytes_accessed = int(x.nbytes + sum(a.nbytes for a in weights) + b_pad * feat * 4)

    pooled = pl.pallas_call(
        functools.partial(mlp_rev_pooled_kernel, bt=bt),
        out_shape=jax.ShapeDtypeStruct((b_pad, feat), jnp.float32),
        grid_spec=pltpu.PrefetchScalarGridSpec(
            num_scalar_prefetch=0,
            grid=grid,
            in_specs=in_specs,
            out_specs=pl.BlockSpec((bt, feat), lambda bi, ni: (bi, 0)),
            scratch_shapes=[pltpu.VMEM((bt, feat), jnp.float32)],
        ),
        compiler_params=pltpu.CompilerParams(
            dimension_semantics=("parallel", "arbitrary"),
            vmem_limit_bytes=32 * 1024 * 1024,
        ),
        cost_estimate=pl.CostEstimate(
            flops=flops, transcendentals=0, bytes_accessed=bytes_accessed),
    )(x, *weights)

    pooled = pooled[:B]                                         # drop batch padding
    # Head: conv6_1/2/3 + bn6_1/2/3 + ReLU, concatenated to 62 channels.
    # Tiny (B,1024)@(1024,62) matmul -> plain XLA op keeps the kernel output lane-dense.
    return jax.nn.relu(pooled @ w6 + b6)


def make_params(key):
    """Deterministic synthetic params; BN (inference form) folded into weight/bias."""
    eps = 1e-5
    layer_dims = [(3, 64), (64, 64), (64, 64), (64, 128), (128, 1024)]
    head_dims = [(1024, 12), (1024, 40), (1024, 10)]

    def one_layer(k, cin, cout):
        k1, k2, k3, k4, k5, k6 = jax.random.split(k, 6)
        bound = 1.0 / jnp.sqrt(float(cin))
        w = jax.random.uniform(k1, (cin, cout), jnp.float32, -bound, bound)
        conv_b = jax.random.uniform(k2, (cout,), jnp.float32, -bound, bound)
        gamma = jax.random.uniform(k3, (cout,), jnp.float32, 0.5, 1.5)
        beta = jax.random.uniform(k4, (cout,), jnp.float32, -0.1, 0.1)
        run_mean = jax.random.uniform(k5, (cout,), jnp.float32, -0.1, 0.1)
        run_var = jax.random.uniform(k6, (cout,), jnp.float32, 0.5, 1.5)
        scale = gamma / jnp.sqrt(run_var + eps)
        w_folded = w * scale[None, :]                   # fold BN scale into conv weight
        b_folded = beta + scale * (conv_b - run_mean)   # fold BN shift with conv bias
        return w_folded, b_folded.reshape(1, cout)

    keys = jax.random.split(key, len(layer_dims) + len(head_dims))
    params = []
    for i, (ci, co) in enumerate(layer_dims):
        w, b = one_layer(keys[i], ci, co)
        if i > 0:                                       # layers 2-5 use the bf16 MXU path
            w = w.astype(jnp.bfloat16)
        params.append((w, b))

    # Three heads (conv6_1/2/3 + bn6_1/2/3) concatenated along output channels; f32.
    hw, hb = [], []
    for j, (ci, co) in enumerate(head_dims):
        w, b = one_layer(keys[len(layer_dims) + j], ci, co)
        hw.append(w)
        hb.append(b)
    params.append((jnp.concatenate(hw, axis=1), jnp.concatenate(hb, axis=1)))
    return params


def reference_forward(x_ncw, params):
    """Pure-JAX reference mirroring the kernel math (same dtypes/casts)."""
    (w1, b1), (w2, b2), (w3, b3), (w4, b4), (w5, b5), (w6, b6) = params
    h = jnp.transpose(x_ncw, (0, 2, 1)).astype(jnp.float32)     # (B, N, 3)
    h = jax.nn.relu(h @ w1 + b1)
    for w, b in ((w2, b2), (w3, b3), (w4, b4), (w5, b5)):
        h = jax.nn.relu(
            jnp.dot(h.astype(w.dtype), w, preferred_element_type=jnp.float32) + b)
    g = jnp.max(h, axis=1)                                      # (B, 1024)
    return jax.nn.relu(g @ w6 + b6)                             # (B, 62)


if __name__ == "__main__":
    B, num_pts = 2, 16
    key = jax.random.PRNGKey(0)
    kx, kp = jax.random.split(key)
    x = jax.random.normal(kx, (B, 3, num_pts), jnp.float32)     # PyTorch NCW layout
    params = make_params(kp)

    out = jax.block_until_ready(mlp_rev_forward(x, params))
    ref = jax.block_until_ready(reference_forward(x, params))

    assert out.shape == (B, 62), out.shape
    assert jnp.allclose(out, ref, atol=2e-3, rtol=2e-3), (
        "mismatch vs reference, max abs err = %g"
        % float(jnp.max(jnp.abs(out - ref))))
    print("KERNEL_OK")
</pallas_src>

<mosaic_0001>
module attributes {stable_mosaic.version = 11 : i64} {
  func.func @mlp_rev_pooled_kernel(%arg0: i32, %arg1: i32, %arg2: memref<2x16x3xf32, #tpu.memory_space<vmem>>, %arg3: memref<3x64xf32, #tpu.memory_space<vmem>>, %arg4: memref<1x64xf32, #tpu.memory_space<vmem>>, %arg5: memref<64x64xbf16, #tpu.memory_space<vmem>>, %arg6: memref<1x64xf32, #tpu.memory_space<vmem>>, %arg7: memref<64x64xbf16, #tpu.memory_space<vmem>>, %arg8: memref<1x64xf32, #tpu.memory_space<vmem>>, %arg9: memref<64x128xbf16, #tpu.memory_space<vmem>>, %arg10: memref<1x128xf32, #tpu.memory_space<vmem>>, %arg11: memref<128x1024xbf16, #tpu.memory_space<vmem>>, %arg12: memref<1x1024xf32, #tpu.memory_space<vmem>>, %arg13: memref<2x1024xf32, #tpu.memory_space<vmem>>, %arg14: memref<2x1024xf32, #tpu.memory_space<vmem>>) attributes {dimension_semantics = [#tpu.dimension_semantics<parallel>, #tpu.dimension_semantics<arbitrary>], iteration_bounds = array<i64: 1, 1>, scalar_prefetch = 0 : i64, scratch_operands = 1 : i64, tpu.core_type = #tpu.core_type<tc>, window_params = [{transform_indices = @transform_0, window_bounds = array<i64: 2, 16, 3>}, {pipeline_mode = #tpu.pipeline_mode<synchronous>, transform_indices = @transform_1, window_bounds = array<i64: 3, 64>}, {pipeline_mode = #tpu.pipeline_mode<synchronous>, transform_indices = @transform_2, window_bounds = array<i64: 1, 64>}, {pipeline_mode = #tpu.pipeline_mode<synchronous>, transform_indices = @transform_3, window_bounds = array<i64: 64, 64>}, {pipeline_mode = #tpu.pipeline_mode<synchronous>, transform_indices = @transform_4, window_bounds = array<i64: 1, 64>}, {pipeline_mode = #tpu.pipeline_mode<synchronous>, transform_indices = @transform_5, window_bounds = array<i64: 64, 64>}, {pipeline_mode = #tpu.pipeline_mode<synchronous>, transform_indices = @transform_6, window_bounds = array<i64: 1, 64>}, {pipeline_mode = #tpu.pipeline_mode<synchronous>, transform_indices = @transform_7, window_bounds = array<i64: 64, 128>}, {pipeline_mode = #tpu.pipeline_mode<synchronous>, transform_indices = @transform_8, window_bounds = array<i64: 1, 128>}, {pipeline_mode = #tpu.pipeline_mode<synchronous>, transform_indices = @transform_9, window_bounds = array<i64: 128, 1024>}, {pipeline_mode = #tpu.pipeline_mode<synchronous>, transform_indices = @transform_10, window_bounds = array<i64: 1, 1024>}, {transform_indices = @transform_11, window_bounds = array<i64: 2, 1024>}]} {
    %c0_i32 = arith.constant 0 : i32
    %0 = arith.cmpi eq, %arg1, %c0_i32 : i32
    %1 = arith.extui %0 : i1 to i32
    %c0_i32_0 = arith.constant 0 : i32
    %2 = arith.cmpi ne, %1, %c0_i32_0 : i32
    scf.if %2 {
      %cst_70 = arith.constant 0.000000e+00 : f32
      %128 = vector.broadcast %cst_70 : f32 to vector<2x1024xf32>
      %c0_71 = arith.constant 0 : index
      %c0_72 = arith.constant 0 : index
      %129 = vector.load %arg14[%c0_71, %c0_72] : memref<2x1024xf32, #tpu.memory_space<vmem>>, vector<2x1024xf32>
      tpu.vector_store %arg14[%c0_71, %c0_72], %128 {strides = array<i32>} : memref<2x1024xf32, #tpu.memory_space<vmem>>, vector<2x1024xf32>,
    } else {
    }
    %c0 = arith.constant 0 : index
    %c0_1 = arith.constant 0 : index
    %3 = vector.load %arg3[%c0, %c0_1] : memref<3x64xf32, #tpu.memory_space<vmem>>, vector<3x64xf32>
    %c0_2 = arith.constant 0 : index
    %c0_3 = arith.constant 0 : index
    %4 = vector.load %arg4[%c0_2, %c0_3] : memref<1x64xf32, #tpu.memory_space<vmem>>, vector<1x64xf32>
    %c0_4 = arith.constant 0 : index
    %c0_5 = arith.constant 0 : index
    %c0_6 = arith.constant 0 : index
    %5 = vector.load %arg2[%c0_4, %c0_5, %c0_6] : memref<2x16x3xf32, #tpu.memory_space<vmem>>, vector<1x16x3xf32>
    %6 = vector.shape_cast %5 : vector<1x16x3xf32> to vector<16x3xf32>
    %7 = vector.extract_strided_slice %6 {offsets = [0, 0], sizes = [16, 1], strides = [1, 1]} : vector<16x3xf32> to vector<16x1xf32>
    %8 = vector.extract_strided_slice %3 {offsets = [0, 0], sizes = [1, 64], strides = [1, 1]} : vector<3x64xf32> to vector<1x64xf32>
    %9 = vector.broadcast %7 : vector<16x1xf32> to vector<16x64xf32>
    %10 = vector.broadcast %8 : vector<1x64xf32> to vector<16x64xf32>
    %11 = arith.mulf %9, %10 : vector<16x64xf32>
    %12 = vector.extract_strided_slice %6 {offsets = [0, 1], sizes = [16, 1], strides = [1, 1]} : vector<16x3xf32> to vector<16x1xf32>
    %13 = vector.extract_strided_slice %3 {offsets = [1, 0], sizes = [1, 64], strides = [1, 1]} : vector<3x64xf32> to vector<1x64xf32>
    %14 = vector.broadcast %12 : vector<16x1xf32> to vector<16x64xf32>
    %15 = vector.broadcast %13 : vector<1x64xf32> to vector<16x64xf32>
    %16 = arith.mulf %14, %15 : vector<16x64xf32>
    %17 = arith.addf %11, %16 : vector<16x64xf32>
    %18 = vector.extract_strided_slice %6 {offsets = [0, 2], sizes = [16, 1], strides = [1, 1]} : vector<16x3xf32> to vector<16x1xf32>
    %19 = vector.extract_strided_slice %3 {offsets = [2, 0], sizes = [1, 64], strides = [1, 1]} : vector<3x64xf32> to vector<1x64xf32>
    %20 = vector.broadcast %18 : vector<16x1xf32> to vector<16x64xf32>
    %21 = vector.broadcast %19 : vector<1x64xf32> to vector<16x64xf32>
    %22 = arith.mulf %20, %21 : vector<16x64xf32>
    %23 = arith.addf %17, %22 : vector<16x64xf32>
    %24 = vector.broadcast %4 : vector<1x64xf32> to vector<16x64xf32>
    %25 = arith.addf %23, %24 : vector<16x64xf32>
    %cst = arith.constant 0.000000e+00 : f32
    %26 = vector.broadcast %cst : f32 to vector<16x64xf32>
    %27 = arith.maximumf %25, %26 : vector<16x64xf32>
    %28 = arith.truncf %27 : vector<16x64xf32> to vector<16x64xbf16>
    %c0_7 = arith.constant 0 : index
    %c0_8 = arith.constant 0 : index
    %29 = vector.load %arg5[%c0_7, %c0_8] : memref<64x64xbf16, #tpu.memory_space<vmem>>, vector<64x64xbf16>
    %cst_9 = arith.constant dense<0.000000e+00> : vector<16x64xf32>
    %30 = tpu.matmul %28, %29, %cst_9 {dimension_numbers = #tpu.dot_dimension_numbers<[1], [0], [0], [1], [0, 0, 1, 1], [], []>} : vector<16x64xbf16>, vector<64x64xbf16>, vector<16x64xf32> -> vector<16x64xf32>
    %c0_10 = arith.constant 0 : index
    %c0_11 = arith.constant 0 : index
    %31 = vector.load %arg6[%c0_10, %c0_11] : memref<1x64xf32, #tpu.memory_space<vmem>>, vector<1x64xf32>
    %32 = vector.broadcast %31 : vector<1x64xf32> to vector<16x64xf32>
    %33 = arith.addf %30, %32 : vector<16x64xf32>
    %cst_12 = arith.constant 0.000000e+00 : f32
    %34 = vector.broadcast %cst_12 : f32 to vector<16x64xf32>
    %35 = arith.maximumf %33, %34 : vector<16x64xf32>
    %36 = arith.truncf %35 : vector<16x64xf32> to vector<16x64xbf16>
    %c0_13 = arith.constant 0 : index
    %c0_14 = arith.constant 0 : index
    %37 = vector.load %arg7[%c0_13, %c0_14] : memref<64x64xbf16, #tpu.memory_space<vmem>>, vector<64x64xbf16>
    %cst_15 = arith.constant dense<0.000000e+00> : vector<16x64xf32>
    %38 = tpu.matmul %36, %37, %cst_15 {dimension_numbers = #tpu.dot_dimension_numbers<[1], [0], [0], [1], [0, 0, 1, 1], [], []>} : vector<16x64xbf16>, vector<64x64xbf16>, vector<16x64xf32> -> vector<16x64xf32>
    %c0_16 = arith.constant 0 : index
    %c0_17 = arith.constant 0 : index
    %39 = vector.load %arg8[%c0_16, %c0_17] : memref<1x64xf32, #tpu.memory_space<vmem>>, vector<1x64xf32>
    %40 = vector.broadcast %39 : vector<1x64xf32> to vector<16x64xf32>
    %41 = arith.addf %38, %40 : vector<16x64xf32>
    %cst_18 = arith.constant 0.000000e+00 : f32
    %42 = vector.broadcast %cst_18 : f32 to vector<16x64xf32>
    %43 = arith.maximumf %41, %42 : vector<16x64xf32>
    %44 = arith.truncf %43 : vector<16x64xf32> to vector<16x64xbf16>
    %c0_19 = arith.constant 0 : index
    %c0_20 = arith.constant 0 : index
    %45 = vector.load %arg9[%c0_19, %c0_20] : memref<64x128xbf16, #tpu.memory_space<vmem>>, vector<64x128xbf16>
    %cst_21 = arith.constant dense<0.000000e+00> : vector<16x128xf32>
    %46 = tpu.matmul %44, %45, %cst_21 {dimension_numbers = #tpu.dot_dimension_numbers<[1], [0], [0], [1], [0, 0, 1, 1], [], []>} : vector<16x64xbf16>, vector<64x128xbf16>, vector<16x128xf32> -> vector<16x128xf32>
    %c0_22 = arith.constant 0 : index
    %c0_23 = arith.constant 0 : index
    %47 = vector.load %arg10[%c0_22, %c0_23] : memref<1x128xf32, #tpu.memory_space<vmem>>, vector<1x128xf32>
    %48 = vector.broadcast %47 : vector<1x128xf32> to vector<16x128xf32>
    %49 = arith.addf %46, %48 : vector<16x128xf32>
    %cst_24 = arith.constant 0.000000e+00 : f32
    %50 = vector.broadcast %cst_24 : f32 to vector<16x128xf32>
    %51 = arith.maximumf %49, %50 : vector<16x128xf32>
    %52 = arith.truncf %51 : vector<16x128xf32> to vector<16x128xbf16>
    %c0_25 = arith.constant 0 : index
    %c0_26 = arith.constant 0 : index
    %53 = vector.load %arg11[%c0_25, %c0_26] : memref<128x1024xbf16, #tpu.memory_space<vmem>>, vector<128x1024xbf16>
    %cst_27 = arith.constant dense<0.000000e+00> : vector<16x1024xf32>
    %54 = tpu.matmul %52, %53, %cst_27 {dimension_numbers = #tpu.dot_dimension_numbers<[1], [0], [0], [1], [0, 0, 1, 1], [], []>} : vector<16x128xbf16>, vector<128x1024xbf16>, vector<16x1024xf32> -> vector<16x1024xf32>
    %c0_28 = arith.constant 0 : index
    %c0_29 = arith.constant 0 : index
    %55 = vector.load %arg12[%c0_28, %c0_29] : memref<1x1024xf32, #tpu.memory_space<vmem>>, vector<1x1024xf32>
    %56 = vector.broadcast %55 : vector<1x1024xf32> to vector<16x1024xf32>
    %57 = arith.addf %54, %56 : vector<16x1024xf32>
    %cst_30 = arith.constant 0.000000e+00 : f32
    %58 = vector.broadcast %cst_30 : f32 to vector<16x1024xf32>
    %59 = arith.maximumf %57, %58 : vector<16x1024xf32>
    %cst_31 = arith.constant dense<0xFF800000> : vector<1024xf32>
    %60 = vector.multi_reduction <maximumf>, %59, %cst_31 [0] : vector<16x1024xf32> to vector<1024xf32>
    %61 = vector.shape_cast %60 : vector<1024xf32> to vector<1x1024xf32>
    %c0_32 = arith.constant 0 : index
    %c0_33 = arith.constant 0 : index
    %62 = vector.load %arg14[%c0_32, %c0_33] : memref<2x1024xf32, #tpu.memory_space<vmem>>, vector<1x1024xf32>
    %63 = arith.maximumf %62, %61 : vector<1x1024xf32>
    %c0_34 = arith.constant 0 : index
    %c0_35 = arith.constant 0 : index
    %64 = vector.load %arg14[%c0_34, %c0_35] : memref<2x1024xf32, #tpu.memory_space<vmem>>, vector<1x1024xf32>
    tpu.vector_store %arg14[%c0_34, %c0_35], %63 {strides = array<i32>} : memref<2x1024xf32, #tpu.memory_space<vmem>>, vector<1x1024xf32>,
    %c1 = arith.constant 1 : index
    %c0_36 = arith.constant 0 : index
    %c0_37 = arith.constant 0 : index
    %65 = vector.load %arg2[%c1, %c0_36, %c0_37] : memref<2x16x3xf32, #tpu.memory_space<vmem>>, vector<1x16x3xf32>
    %66 = vector.shape_cast %65 : vector<1x16x3xf32> to vector<16x3xf32>
    %67 = vector.extract_strided_slice %66 {offsets = [0, 0], sizes = [16, 1], strides = [1, 1]} : vector<16x3xf32> to vector<16x1xf32>
    %68 = vector.extract_strided_slice %3 {offsets = [0, 0], sizes = [1, 64], strides = [1, 1]} : vector<3x64xf32> to vector<1x64xf32>
    %69 = vector.broadcast %67 : vector<16x1xf32> to vector<16x64xf32>
    %70 = vector.broadcast %68 : vector<1x64xf32> to vector<16x64xf32>
    %71 = arith.mulf %69, %70 : vector<16x64xf32>
    %72 = vector.extract_strided_slice %66 {offsets = [0, 1], sizes = [16, 1], strides = [1, 1]} : vector<16x3xf32> to vector<16x1xf32>
    %73 = vector.extract_strided_slice %3 {offsets = [1, 0], sizes = [1, 64], strides = [1, 1]} : vector<3x64xf32> to vector<1x64xf32>
    %74 = vector.broadcast %72 : vector<16x1xf32> to vector<16x64xf32>
    %75 = vector.broadcast %73 : vector<1x64xf32> to vector<16x64xf32>
    %76 = arith.mulf %74, %75 : vector<16x64xf32>
    %77 = arith.addf %71, %76 : vector<16x64xf32>
    %78 = vector.extract_strided_slice %66 {offsets = [0, 2], sizes = [16, 1], strides = [1, 1]} : vector<16x3xf32> to vector<16x1xf32>
    %79 = vector.extract_strided_slice %3 {offsets = [2, 0], sizes = [1, 64], strides = [1, 1]} : vector<3x64xf32> to vector<1x64xf32>
    %80 = vector.broadcast %78 : vector<16x1xf32> to vector<16x64xf32>
    %81 = vector.broadcast %79 : vector<1x64xf32> to vector<16x64xf32>
    %82 = arith.mulf %80, %81 : vector<16x64xf32>
    %83 = arith.addf %77, %82 : vector<16x64xf32>
    %84 = vector.broadcast %4 : vector<1x64xf32> to vector<16x64xf32>
    %85 = arith.addf %83, %84 : vector<16x64xf32>
    %cst_38 = arith.constant 0.000000e+00 : f32
    %86 = vector.broadcast %cst_38 : f32 to vector<16x64xf32>
    %87 = arith.maximumf %85, %86 : vector<16x64xf32>
    %88 = arith.truncf %87 : vector<16x64xf32> to vector<16x64xbf16>
    %c0_39 = arith.constant 0 : index
    %c0_40 = arith.constant 0 : index
    %89 = vector.load %arg5[%c0_39, %c0_40] : memref<64x64xbf16, #tpu.memory_space<vmem>>, vector<64x64xbf16>
    %cst_41 = arith.constant dense<0.000000e+00> : vector<16x64xf32>
    %90 = tpu.matmul %88, %89, %cst_41 {dimension_numbers = #tpu.dot_dimension_numbers<[1], [0], [0], [1], [0, 0, 1, 1], [], []>} : vector<16x64xbf16>, vector<64x64xbf16>, vector<16x64xf32> -> vector<16x64xf32>
    %c0_42 = arith.constant 0 : index
    %c0_43 = arith.constant 0 : index
    %91 = vector.load %arg6[%c0_42, %c0_43] : memref<1x64xf32, #tpu.memory_space<vmem>>, vector<1x64xf32>
    %92 = vector.broadcast %91 : vector<1x64xf32> to vector<16x64xf32>
    %93 = arith.addf %90, %92 : vector<16x64xf32>
    %cst_44 = arith.constant 0.000000e+00 : f32
    %94 = vector.broadcast %cst_44 : f32 to vector<16x64xf32>
    %95 = arith.maximumf %93, %94 : vector<16x64xf32>
    %96 = arith.truncf %95 : vector<16x64xf32> to vector<16x64xbf16>
    %c0_45 = arith.constant 0 : index
    %c0_46 = arith.constant 0 : index
    %97 = vector.load %arg7[%c0_45, %c0_46] : memref<64x64xbf16, #tpu.memory_space<vmem>>, vector<64x64xbf16>
    %cst_47 = arith.constant dense<0.000000e+00> : vector<16x64xf32>
    %98 = tpu.matmul %96, %97, %cst_47 {dimension_numbers = #tpu.dot_dimension_numbers<[1], [0], [0], [1], [0, 0, 1, 1], [], []>} : vector<16x64xbf16>, vector<64x64xbf16>, vector<16x64xf32> -> vector<16x64xf32>
    %c0_48 = arith.constant 0 : index
    %c0_49 = arith.constant 0 : index
    %99 = vector.load %arg8[%c0_48, %c0_49] : memref<1x64xf32, #tpu.memory_space<vmem>>, vector<1x64xf32>
    %100 = vector.broadcast %99 : vector<1x64xf32> to vector<16x64xf32>
    %101 = arith.addf %98, %100 : vector<16x64xf32>
    %cst_50 = arith.constant 0.000000e+00 : f32
    %102 = vector.broadcast %cst_50 : f32 to vector<16x64xf32>
    %103 = arith.maximumf %101, %102 : vector<16x64xf32>
    %104 = arith.truncf %103 : vector<16x64xf32> to vector<16x64xbf16>
    %c0_51 = arith.constant 0 : index
    %c0_52 = arith.constant 0 : index
    %105 = vector.load %arg9[%c0_51, %c0_52] : memref<64x128xbf16, #tpu.memory_space<vmem>>, vector<64x128xbf16>
    %cst_53 = arith.constant dense<0.000000e+00> : vector<16x128xf32>
    %106 = tpu.matmul %104, %105, %cst_53 {dimension_numbers = #tpu.dot_dimension_numbers<[1], [0], [0], [1], [0, 0, 1, 1], [], []>} : vector<16x64xbf16>, vector<64x128xbf16>, vector<16x128xf32> -> vector<16x128xf32>
    %c0_54 = arith.constant 0 : index
    %c0_55 = arith.constant 0 : index
    %107 = vector.load %arg10[%c0_54, %c0_55] : memref<1x128xf32, #tpu.memory_space<vmem>>, vector<1x128xf32>
    %108 = vector.broadcast %107 : vector<1x128xf32> to vector<16x128xf32>
    %109 = arith.addf %106, %108 : vector<16x128xf32>
    %cst_56 = arith.constant 0.000000e+00 : f32
    %110 = vector.broadcast %cst_56 : f32 to vector<16x128xf32>
    %111 = arith.maximumf %109, %110 : vector<16x128xf32>
    %112 = arith.truncf %111 : vector<16x128xf32> to vector<16x128xbf16>
    %c0_57 = arith.constant 0 : index
    %c0_58 = arith.constant 0 : index
    %113 = vector.load %arg11[%c0_57, %c0_58] : memref<128x1024xbf16, #tpu.memory_space<vmem>>, vector<128x1024xbf16>
    %cst_59 = arith.constant dense<0.000000e+00> : vector<16x1024xf32>
    %114 = tpu.matmul %112, %113, %cst_59 {dimension_numbers = #tpu.dot_dimension_numbers<[1], [0], [0], [1], [0, 0, 1, 1], [], []>} : vector<16x128xbf16>, vector<128x1024xbf16>, vector<16x1024xf32> -> vector<16x1024xf32>
    %c0_60 = arith.constant 0 : index
    %c0_61 = arith.constant 0 : index
    %115 = vector.load %arg12[%c0_60, %c0_61] : memref<1x1024xf32, #tpu.memory_space<vmem>>, vector<1x1024xf32>
    %116 = vector.broadcast %115 : vector<1x1024xf32> to vector<16x1024xf32>
    %117 = arith.addf %114, %116 : vector<16x1024xf32>
    %cst_62 = arith.constant 0.000000e+00 : f32
    %118 = vector.broadcast %cst_62 : f32 to vector<16x1024xf32>
    %119 = arith.maximumf %117, %118 : vector<16x1024xf32>
    %cst_63 = arith.constant dense<0xFF800000> : vector<1024xf32>
    %120 = vector.multi_reduction <maximumf>, %119, %cst_63 [0] : vector<16x1024xf32> to vector<1024xf32>
    %121 = vector.shape_cast %120 : vector<1024xf32> to vector<1x1024xf32>
    %c1_64 = arith.constant 1 : index
    %c0_65 = arith.constant 0 : index
    %122 = vector.load %arg14[%c1_64, %c0_65] : memref<2x1024xf32, #tpu.memory_space<vmem>>, vector<1x1024xf32>
    %123 = arith.maximumf %122, %121 : vector<1x1024xf32>
    %c1_66 = arith.constant 1 : index
    %c0_67 = arith.constant 0 : index
    %124 = vector.load %arg14[%c1_66, %c0_67] : memref<2x1024xf32, #tpu.memory_space<vmem>>, vector<1x1024xf32>
    tpu.vector_store %arg14[%c1_66, %c0_67], %123 {strides = array<i32>} : memref<2x1024xf32, #tpu.memory_space<vmem>>, vector<1x1024xf32>,
    %c0_i32_68 = arith.constant 0 : i32
    %125 = arith.cmpi eq, %arg1, %c0_i32_68 : i32
    %126 = arith.extui %125 : i1 to i32
    %c0_i32_69 = arith.constant 0 : i32
    %127 = arith.cmpi ne, %126, %c0_i32_69 : i32
    scf.if %127 {
      %c0_70 = arith.constant 0 : index
      %c0_71 = arith.constant 0 : index
      %128 = vector.load %arg14[%c0_70, %c0_71] : memref<2x1024xf32, #tpu.memory_space<vmem>>, vector<2x1024xf32>
      %c0_72 = arith.constant 0 : index
      %c0_73 = arith.constant 0 : index
      %129 = vector.load %arg13[%c0_72, %c0_73] : memref<2x1024xf32, #tpu.memory_space<vmem>>, vector<2x1024xf32>
      tpu.vector_store %arg13[%c0_72, %c0_73], %128 {strides = array<i32>} : memref<2x1024xf32, #tpu.memory_space<vmem>>, vector<2x1024xf32>,
    } else {
    }
    return
  }
  func.func @transform_0(%arg0: i32, %arg1: i32) -> (i32, i32, i32) {
    %c0_i32 = arith.constant 0 : i32
    %c0_i32_0 = arith.constant 0 : i32
    return %arg0, %arg1, %c0_i32 : i32, i32, i32
  }
  func.func @transform_1(%arg0: i32, %arg1: i32) -> (i32, i32) {
    %c0_i32 = arith.constant 0 : i32
    %c0_i32_0 = arith.constant 0 : i32
    %c0_i32_1 = arith.constant 0 : i32
    return %c0_i32, %c0_i32_0 : i32, i32
  }
  func.func @transform_2(%arg0: i32, %arg1: i32) -> (i32, i32) {
    %c0_i32 = arith.constant 0 : i32
    %c0_i32_0 = arith.constant 0 : i32
    %c0_i32_1 = arith.constant 0 : i32
    return %c0_i32, %c0_i32_0 : i32, i32
  }
  func.func @transform_3(%arg0: i32, %arg1: i32) -> (i32, i32) {
    %c0_i32 = arith.constant 0 : i32
    %c0_i32_0 = arith.constant 0 : i32
    %c0_i32_1 = arith.constant 0 : i32
    return %c0_i32, %c0_i32_0 : i32, i32
  }
  func.func @transform_4(%arg0: i32, %arg1: i32) -> (i32, i32) {
    %c0_i32 = arith.constant 0 : i32
    %c0_i32_0 = arith.constant 0 : i32
    %c0_i32_1 = arith.constant 0 : i32
    return %c0_i32, %c0_i32_0 : i32, i32
  }
  func.func @transform_5(%arg0: i32, %arg1: i32) -> (i32, i32) {
    %c0_i32 = arith.constant 0 : i32
    %c0_i32_0 = arith.constant 0 : i32
    %c0_i32_1 = arith.constant 0 : i32
    return %c0_i32, %c0_i32_0 : i32, i32
  }
  func.func @transform_6(%arg0: i32, %arg1: i32) -> (i32, i32) {
    %c0_i32 = arith.constant 0 : i32
    %c0_i32_0 = arith.constant 0 : i32
    %c0_i32_1 = arith.constant 0 : i32
    return %c0_i32, %c0_i32_0 : i32, i32
  }
  func.func @transform_7(%arg0: i32, %arg1: i32) -> (i32, i32) {
    %c0_i32 = arith.constant 0 : i32
    %c0_i32_0 = arith.constant 0 : i32
    %c0_i32_1 = arith.constant 0 : i32
    return %c0_i32, %c0_i32_0 : i32, i32
  }
  func.func @transform_8(%arg0: i32, %arg1: i32) -> (i32, i32) {
    %c0_i32 = arith.constant 0 : i32
    %c0_i32_0 = arith.constant 0 : i32
    %c0_i32_1 = arith.constant 0 : i32
    return %c0_i32, %c0_i32_0 : i32, i32
  }
  func.func @transform_9(%arg0: i32, %arg1: i32) -> (i32, i32) {
    %c0_i32 = arith.constant 0 : i32
    %c0_i32_0 = arith.constant 0 : i32
    %c0_i32_1 = arith.constant 0 : i32
    return %c0_i32, %c0_i32_0 : i32, i32
  }
  func.func @transform_10(%arg0: i32, %arg1: i32) -> (i32, i32) {
    %c0_i32 = arith.constant 0 : i32
    %c0_i32_0 = arith.constant 0 : i32
    %c0_i32_1 = arith.constant 0 : i32
    return %c0_i32, %c0_i32_0 : i32, i32
  }
  func.func @transform_11(%arg0: i32, %arg1: i32) -> (i32, i32) {
    %c0_i32 = arith.constant 0 : i32
    %c0_i32_0 = arith.constant 0 : i32
    return %arg0, %c0_i32 : i32, i32
  }
}

</mosaic_0001>

<llo_original>
// kernel: tpu_custom_call.1
$region0: #{tpu_custom_call.1}
  #allocation0 [shape = 'u32[]', space=smem, size = 0x4, offset = 0x4, fixed_abs, tag = 'smem constant byte address 0x4 - core index']
  #allocation1 [shape = 'u32[72,128]{1,0:T(1,128)}', space=vmem, size = 0x9000, scoped, tag = 'internal scratch']
  #allocation2 [shape = 'f32[2,1024]{1,0:T(2,128)}', space=vmem, size = 0x2000, scoped, tag = 'scratch operand']
  %s0 = inlined_call_operand.vmem [shape: f32[2,16,3], index: 0, kind: input, shape index: {}]
  %s1 = inlined_call_operand.hbm [shape: f32[3,64], index: 1, kind: input, shape index: {}]
  %s2 = inlined_call_operand.hbm [shape: f32[1,64], index: 2, kind: input, shape index: {}]
  %s3 = inlined_call_operand.vmem [shape: bf16[64,64], index: 3, kind: input, shape index: {}]
  %s4 = inlined_call_operand.vmem [shape: f32[1,64], index: 4, kind: input, shape index: {}]
  %s5 = inlined_call_operand.hbm [shape: bf16[64,64], index: 5, kind: input, shape index: {}]
  %s6 = inlined_call_operand.vmem [shape: f32[1,64], index: 6, kind: input, shape index: {}]
  %s7 = inlined_call_operand.hbm [shape: bf16[64,128], index: 7, kind: input, shape index: {}]
  %s8 = inlined_call_operand.vmem [shape: f32[1,128], index: 8, kind: input, shape index: {}]
  %s9 = inlined_call_operand.hbm [shape: bf16[128,1024], index: 9, kind: input, shape index: {}]
  %s10 = inlined_call_operand.vmem [shape: f32[1,1024], index: 10, kind: input, shape index: {}]
  %s11 = inlined_call_operand.hbm [shape: f32[2,1024], index: 11, kind: output, shape index: {}]
  %s12 = sld [smem:[#allocation0]]
  $region82: #{tpu_custom_call.1} parent=0
    _
  %s14 = ssub.s32 1, %s12
  %s15 = scalar_select 0, %s14, %s12
  $region1: #{tpu_custom_call.1} parent=0
    #allocation3 [shape = 'u8[2048]{0}', space=vmem, size = 0x800, scoped, tag = 'input window, operand 1, single buffered']
    #allocation4 [shape = 's32[1]{0}', space=sflag, size = 0x4, scoped, tag = 'scoped memory for tpu_custom_call.1']
    #allocation5 [shape = 's32[1]{0}', space=sflag, size = 0x4, scoped, tag = 'scoped memory for tpu_custom_call.1']
    #allocation6 [shape = 'u8[512]{0}', space=vmem, size = 0x400, scoped, tag = 'input window, operand 2, single buffered']
    #allocation7 [shape = 's32[1]{0}', space=sflag, size = 0x4, scoped, tag = 'scoped memory for tpu_custom_call.1']
    #allocation8 [shape = 'u8[16384]{0}', space=vmem, size = 0x4000, scoped, tag = 'input window, operand 5, single buffered']
    #allocation9 [shape = 'u8[16384]{0}', space=vmem, size = 0x4000, scoped, tag = 'input window, operand 7, single buffered']
    #allocation10 [shape = 's32[1]{0}', space=sflag, size = 0x4, scoped, tag = 'scoped memory for tpu_custom_call.1']
    #allocation11 [shape = 'u8[262144]{0}', space=vmem, size = 0x40000, scoped, tag = 'input window, operand 9, single buffered']
    #allocation12 [shape = 'u8[8192]{0}', space=vmem, size = 0x2000, scoped, tag = 'output window, operand 0, single buffered']
    %16 = vsyncpa [#allocation4], 0
    %17 = vsyncpa [#allocation7], 0
    %18 = vsyncpa [#allocation10], 0
    %19 = vsyncpa [#allocation5], 0
    // Predicated region
    $region2: #{tpu_custom_call.1} parent=1 // pred_check
      _
    $region3: #{tpu_custom_call.1} parent=1 // pred_check_branch
      %21 = sbr.rel (0) target = $region5
    $region4: #{tpu_custom_call.1} parent=1 // pred_region
      _
    $region5: #{tpu_custom_call.1} parent=1 // pred_fallthru
      _
    // Predicated region
    $region6: #{tpu_custom_call.1} parent=1 // pred_check
      _
    $region7: #{tpu_custom_call.1} parent=1 // pred_check_branch
      %23 = sbr.rel (0) target = $region9
    $region8: #{tpu_custom_call.1} parent=1 // pred_region
      %25 = vsyncadd [#allocation4], 0
      %s27 = sshll.u32 %s1, 4
      %s28 = int_to_ptr.hbm [resolvable:$true] %s27
      %s29 = sshll.u32 [#allocation3], 4
      %s30 = int_to_ptr.vmem [resolvable:$true] %s29
      %32 = dma.hbm_to_vmem [thread:$0]  %s28, 64, %s30, [#allocation4]
    $region9: #{tpu_custom_call.1} parent=1 // pred_fallthru
      _
    // Predicated region
    $region10: #{tpu_custom_call.1} parent=1 // pred_check
      _
    $region11: #{tpu_custom_call.1} parent=1 // pred_check_branch
      %34 = sbr.rel (0) target = $region13
    $region12: #{tpu_custom_call.1} parent=1 // pred_region
      %36 = vsyncadd [#allocation7], 0
      %s38 = sshll.u32 %s2, 4
      %s39 = int_to_ptr.hbm [resolvable:$true] %s38
      %s40 = sshll.u32 [#allocation6], 4
      %s41 = int_to_ptr.vmem [resolvable:$true] %s40
      %43 = dma.hbm_to_vmem [thread:$0]  %s39, 16, %s41, [#allocation7]
    $region13: #{tpu_custom_call.1} parent=1 // pred_fallthru
      _
    // Predicated region
    $region14: #{tpu_custom_call.1} parent=1 // pred_check
      _
    $region15: #{tpu_custom_call.1} parent=1 // pred_check_branch
      %45 = sbr.rel (0) target = $region17
    $region16: #{tpu_custom_call.1} parent=1 // pred_region
      _
    $region17: #{tpu_custom_call.1} parent=1 // pred_fallthru
      _
    // Predicated region
    $region18: #{tpu_custom_call.1} parent=1 // pred_check
      _
    $region19: #{tpu_custom_call.1} parent=1 // pred_check_branch
      %47 = sbr.rel (0) target = $region21
    $region20: #{tpu_custom_call.1} parent=1 // pred_region
      _
    $region21: #{tpu_custom_call.1} parent=1 // pred_fallthru
      _
    // Predicated region
    $region22: #{tpu_custom_call.1} parent=1 // pred_check
      _
    $region23: #{tpu_custom_call.1} parent=1 // pred_check_branch
      %49 = sbr.rel (0) target = $region25
    $region24: #{tpu_custom_call.1} parent=1 // pred_region
      %51 = vsyncadd [#allocation7], 0
      %s52 = sshll.u32 %s5, 4
      %s53 = int_to_ptr.hbm [resolvable:$true] %s52
      %s54 = sshll.u32 [#allocation8], 4
      %s55 = int_to_ptr.vmem [resolvable:$true] %s54
      %60 = dma.hbm_to_vmem [thread:$0]  %s53, 512, %s55, [#allocation7], 64, 64, 4
    $region25: #{tpu_custom_call.1} parent=1 // pred_fallthru
      _
    // Predicated region
    $region26: #{tpu_custom_call.1} parent=1 // pred_check
      _
    $region27: #{tpu_custom_call.1} parent=1 // pred_check_branch
      %62 = sbr.rel (0) target = $region29
    $region28: #{tpu_custom_call.1} parent=1 // pred_region
      _
    $region29: #{tpu_custom_call.1} parent=1 // pred_fallthru
      _
    // Predicated region
    $region30: #{tpu_custom_call.1} parent=1 // pred_check
      _
    $region31: #{tpu_custom_call.1} parent=1 // pred_check_branch
      %64 = sbr.rel (0) target = $region33
    $region32: #{tpu_custom_call.1} parent=1 // pred_region
      %66 = vsyncadd [#allocation10], 0
      %s67 = sshll.u32 %s7, 4
      %s68 = int_to_ptr.hbm [resolvable:$true] %s67
      %s69 = sshll.u32 [#allocation9], 4
      %s70 = int_to_ptr.vmem [resolvable:$true] %s69
      %75 = dma.hbm_to_vmem [thread:$0]  %s68, 512, %s70, [#allocation10], 64, 64, 4
    $region33: #{tpu_custom_call.1} parent=1 // pred_fallthru
      _
    // Predicated region
    $region34: #{tpu_custom_call.1} parent=1 // pred_check
      _
    $region35: #{tpu_custom_call.1} parent=1 // pred_check_branch
      %77 = sbr.rel (0) target = $region37
    $region36: #{tpu_custom_call.1} parent=1 // pred_region
      _
    $region37: #{tpu_custom_call.1} parent=1 // pred_fallthru
      _
    // Predicated region
    $region38: #{tpu_custom_call.1} parent=1 // pred_check
      _
    $region39: #{tpu_custom_call.1} parent=1 // pred_check_branch
      %79 = sbr.rel (0) target = $region41
    $region40: #{tpu_custom_call.1} parent=1 // pred_region
      %81 = vsyncadd [#allocation10], 0
      %s82 = sshll.u32 %s9, 4
      %s83 = int_to_ptr.hbm [resolvable:$true] %s82
      %s84 = sshll.u32 [#allocation11], 4
      %s85 = int_to_ptr.vmem [resolvable:$true] %s84
      %90 = dma.hbm_to_vmem [thread:$0]  %s83, 8192, %s85, [#allocation10], 512, 512, 32
    $region41: #{tpu_custom_call.1} parent=1 // pred_fallthru
      _
    // Predicated region
    $region42: #{tpu_custom_call.1} parent=1 // pred_check
      _
    $region43: #{tpu_custom_call.1} parent=1 // pred_check_branch
      %92 = sbr.rel (0) target = $region45
    $region44: #{tpu_custom_call.1} parent=1 // pred_region
      _
    $region45: #{tpu_custom_call.1} parent=1 // pred_fallthru
      _
    // Predicated region
    $region46: #{tpu_custom_call.1} parent=1 // pred_check
      _
    $region47: #{tpu_custom_call.1} parent=1 // pred_check_branch
      %94 = sbr.rel (0) target = $region49
    $region48: #{tpu_custom_call.1} parent=1 // pred_region
      %96 = dma.done [#allocation4], 64
    $region49: #{tpu_custom_call.1} parent=1 // pred_fallthru
      _
    // Predicated region
    $region50: #{tpu_custom_call.1} parent=1 // pred_check
      _
    $region51: #{tpu_custom_call.1} parent=1 // pred_check_branch
      %98 = sbr.rel (0) target = $region53
    $region52: #{tpu_custom_call.1} parent=1 // pred_region
      %100 = dma.done [#allocation7], 16
    $region53: #{tpu_custom_call.1} parent=1 // pred_fallthru
      _
    // Predicated region
    $region54: #{tpu_custom_call.1} parent=1 // pred_check
      _
    $region55: #{tpu_custom_call.1} parent=1 // pred_check_branch
      %102 = sbr.rel (0) target = $region57
    $region56: #{tpu_custom_call.1} parent=1 // pred_region
      %104 = dma.done [#allocation7], 512
    $region57: #{tpu_custom_call.1} parent=1 // pred_fallthru
      _
    // Predicated region
    $region58: #{tpu_custom_call.1} parent=1 // pred_check
      _
    $region59: #{tpu_custom_call.1} parent=1 // pred_check_branch
      %106 = sbr.rel (0) target = $region61
    $region60: #{tpu_custom_call.1} parent=1 // pred_region
      %108 = dma.done [#allocation10], 512
    $region61: #{tpu_custom_call.1} parent=1 // pred_fallthru
      _
    // Predicated region
    $region62: #{tpu_custom_call.1} parent=1 // pred_check
      _
    $region63: #{tpu_custom_call.1} parent=1 // pred_check_branch
      %110 = sbr.rel (0) target = $region65
    $region64: #{tpu_custom_call.1} parent=1 // pred_region
      %112 = dma.done [#allocation10], 8192
    $region65: #{tpu_custom_call.1} parent=1 // pred_fallthru
      _
    %p114 = scmp.eq.s32.totalorder 0, 0
    // Predicated region
    $region66: #{tpu_custom_call.1} parent=1 // pred_check
      %p115 = pneg %p114
    $region67: #{tpu_custom_call.1} parent=1 // pred_check_branch
      %117 = sbr.rel (%p115) target = $region69
    $region68: #{tpu_custom_call.1} parent=1 // pred_region
      %118 = vst [vmem:[#allocation2] sm:$0xff] 0.0
      %119 = vst [vmem:[#allocation2 + $0x8] sm:$0xff] 0.0
    $region69: #{tpu_custom_call.1} parent=1 // pred_fallthru
      _
    %v120 = vld [vmem:[#allocation3] sm:$0x7]
    %v121 = vld [vmem:[#allocation6] sm:$0x1]
    %v122 = vld [vmem:[%s0] sm:$0xff]
    %v123 = vld [vmem:[%s0 + $0x8] sm:$0xff]
    %125 = vset.pattern.permute.xlu0 0
    %126 = vperm.xlu0 %125, %v122
    %v127 = vpop.permute.xlu0 %126
    %130 = vset.pattern.permute.xlu0 0
    %131 = vperm.xlu0 %130, %v123
    %v132 = vpop.permute.xlu0 %131
    %v134 = vperm.slane %v120, 0
    %v135 = vmul.f32 %v127, %v134
    %v136 = vmul.f32 %v132, %v134
    %137 = vset.pattern.permute.xlu0 1
    %138 = vperm.xlu0 %137, %v122
    %v139 = vpop.permute.xlu0 %138
    %141 = vset.pattern.permute.xlu0 1
    %142 = vperm.xlu0 %141, %v123
    %v143 = vpop.permute.xlu0 %142
    %v145 = vperm.slane %v120, 1
    %v146 = vmul.f32 %v139, %v145
    %v147 = vmul.f32 %v143, %v145
    %v148 = vadd.f32 %v135, %v146
    %v149 = vadd.f32 %v136, %v147
    %150 = vset.pattern.permute.xlu0 2
    %151 = vperm.xlu0 %150, %v122
    %v152 = vpop.permute.xlu0 %151
    %154 = vset.pattern.permute.xlu0 2
    %155 = vperm.xlu0 %154, %v123
    %v156 = vpop.permute.xlu0 %155
    %v158 = vperm.slane %v120, 2
    %v159 = vmul.f32 %v152, %v158
    %v160 = vmul.f32 %v156, %v158
    %v161 = vadd.f32 %v148, %v159
    %v162 = vadd.f32 %v149, %v160
    %v164 = vperm.slane %v121, 0
    %v166 = vadd.f32 %v161, %v164
    %v167 = vadd.f32 %v162, %v164
    %v168 = vmax.f32 %v166, 0.0
    %v169 = vmax.f32 %v167, 0.0
    %v170 = vpack.c.bf16 %v169, %v168
    %v171 = vld [vmem:[%s3] sm:$0xf]
    %v172 = vld [vmem:[%s3 + $0x4] sm:$0xf]
    %v173 = vld [vmem:[%s3 + $0x8] sm:$0xf]
    %v174 = vld [vmem:[%s3 + $0xc] sm:$0xf]
    %v175 = vld [vmem:[%s3 + $0x10] sm:$0xf]
    %v176 = vld [vmem:[%s3 + $0x14] sm:$0xf]
    %v177 = vld [vmem:[%s3 + $0x18] sm:$0xf]
    %v178 = vld [vmem:[%s3 + $0x1c] sm:$0xf]
    %v179 = vld [vmem:[%s4] sm:$0x1]
    %v181 = vperm.slane %v179, 0
    %v191 = vunpack.c.l.b16 %v171
    %v192 = vunpack.c.l.b16 %v172
    %v193 = vunpack.c.l.b16 %v173
    %v194 = vunpack.c.l.b16 %v174
    %v195 = vunpack.c.l.b16 %v175
    %v196 = vunpack.c.l.b16 %v176
    %v197 = vunpack.c.l.b16 %v177
    %v198 = vunpack.c.l.b16 %v178
    %v199 = vpack.c.b16 %v192, %v191
    %v200 = vpack.c.b16 %v194, %v193
    %v201 = vpack.c.b16 %v196, %v195
    %v202 = vpack.c.b16 %v198, %v197
    %vm207 = vcmask 523264
    %v209 = vsel %vm207, %v170, 0
    %211 = vmatpush.bf16.msra.mxu0 0
    %212 = vmatpush.bf16.msra.mxu0 0
    %213 = vmatpush.bf16.msra.mxu0 0
    %214 = vmatpush.bf16.msra.mxu0 0
    %215 = vmatpush.bf16.msra.mxu0 %v202
    %216 = vmatpush.bf16.msra.mxu0 %v201
    %217 = vmatpush.bf16.msra.mxu0 %v200
    %218 = vmatpush.bf16.msra.mxu0 %v199
    %219 = vmatmul.bf16.gmra.mxu0 %v209
    %v220 = vpop.f32.mrf.mxu0
    %v221 = vadd.f32 %v181, %v220
    %v222 = vpop.f32.mrf.mxu0
    %v223 = vadd.f32 %v181, %v222
    %224 = vdwg.mxu0
    %v225 = vmax.f32 %v221, 0.0
    %v226 = vmax.f32 %v223, 0.0
    %v227 = vpack.c.bf16 %v226, %v225
    %v228 = vld [vmem:[#allocation8] sm:$0xf]
    %v229 = vld [vmem:[#allocation8 + $0x4] sm:$0xf]
    %v230 = vld [vmem:[#allocation8 + $0x8] sm:$0xf]
    %v231 = vld [vmem:[#allocation8 + $0xc] sm:$0xf]
    %v232 = vld [vmem:[#allocation8 + $0x10] sm:$0xf]
    %v233 = vld [vmem:[#allocation8 + $0x14] sm:$0xf]
    %v234 = vld [vmem:[#allocation8 + $0x18] sm:$0xf]
    %v235 = vld [vmem:[#allocation8 + $0x1c] sm:$0xf]
    %v236 = vld [vmem:[%s6] sm:$0x1]
    %v238 = vperm.slane %v236, 0
    %v248 = vunpack.c.l.b16 %v228
    %v249 = vunpack.c.l.b16 %v229
    %v250 = vunpack.c.l.b16 %v230
    %v251 = vunpack.c.l.b16 %v231
    %v252 = vunpack.c.l.b16 %v232
    %v253 = vunpack.c.l.b16 %v233
    %v254 = vunpack.c.l.b16 %v234
    %v255 = vunpack.c.l.b16 %v235
    %v256 = vpack.c.b16 %v249, %v248
    %v257 = vpack.c.b16 %v251, %v250
    %v258 = vpack.c.b16 %v253, %v252
    %v259 = vpack.c.b16 %v255, %v254
    %v265 = vsel %vm207, %v227, 0
    %267 = vmatpush.bf16.msra.mxu0 0
    %268 = vmatpush.bf16.msra.mxu0 0
    %269 = vmatpush.bf16.msra.mxu0 0
    %270 = vmatpush.bf16.msra.mxu0 0
    %271 = vmatpush.bf16.msra.mxu0 %v259
    %272 = vmatpush.bf16.msra.mxu0 %v258
    %273 = vmatpush.bf16.msra.mxu0 %v257
    %274 = vmatpush.bf16.msra.mxu0 %v256
    %275 = vmatmul.bf16.gmra.mxu0 %v265
    %v276 = vpop.f32.mrf.mxu0
    %v277 = vadd.f32 %v238, %v276
    %v278 = vpop.f32.mrf.mxu0
    %v279 = vadd.f32 %v238, %v278
    %280 = vdwg.mxu0
    %v281 = vmax.f32 %v277, 0.0
    %v282 = vmax.f32 %v279, 0.0
    %v283 = vpack.c.bf16 %v282, %v281
    %v284 = vld [vmem:[#allocation9] sm:$0xf]
    %v285 = vld [vmem:[#allocation9 + $0x4] sm:$0xf]
    %v286 = vld [vmem:[#allocation9 + $0x8] sm:$0xf]
    %v287 = vld [vmem:[#allocation9 + $0xc] sm:$0xf]
    %v288 = vld [vmem:[#allocation9 + $0x10] sm:$0xf]
    %v289 = vld [vmem:[#allocation9 + $0x14] sm:$0xf]
    %v290 = vld [vmem:[#allocation9 + $0x18] sm:$0xf]
    %v291 = vld [vmem:[#allocation9 + $0x1c] sm:$0xf]
    %v292 = vld [vmem:[%s8] sm:$0x1]
    %v294 = vperm.slane %v292, 0
    %v304 = vunpack.c.l.b16 %v284
    %v305 = vunpack.c.l.b16 %v285
    %v306 = vunpack.c.l.b16 %v286
    %v307 = vunpack.c.l.b16 %v287
    %v308 = vunpack.c.l.b16 %v288
    %v309 = vunpack.c.l.b16 %v289
    %v310 = vunpack.c.l.b16 %v290
    %v311 = vunpack.c.l.b16 %v291
    %v312 = vpack.c.b16 %v305, %v304
    %v313 = vpack.c.b16 %v307, %v306
    %v314 = vpack.c.b16 %v309, %v308
    %v315 = vpack.c.b16 %v311, %v310
    %v321 = vsel %vm207, %v283, 0
    %323 = vmatpush.bf16.msra.mxu0 0
    %324 = vmatpush.bf16.msra.mxu0 0
    %325 = vmatpush.bf16.msra.mxu0 0
    %326 = vmatpush.bf16.msra.mxu0 0
    %327 = vmatpush.bf16.msra.mxu0 %v315
    %328 = vmatpush.bf16.msra.mxu0 %v314
    %329 = vmatpush.bf16.msra.mxu0 %v313
    %330 = vmatpush.bf16.msra.mxu0 %v312
    %331 = vmatmul.bf16.gmra.mxu0 %v321
    %v332 = vpop.f32.mrf.mxu0
    %v333 = vadd.f32 %v294, %v332
    %v334 = vpop.f32.mrf.mxu0
    %v335 = vadd.f32 %v294, %v334
    %336 = vdwg.mxu0
    %v337 = vmax.f32 %v333, 0.0
    %v338 = vmax.f32 %v335, 0.0
    %v339 = vpack.c.bf16 %v338, %v337
    %v340 = vld [vmem:[#allocation11] sm:$0xff]
    %v341 = vld [vmem:[#allocation11 + $0x8] sm:$0xff]
    %v342 = vld [vmem:[#allocation11 + $0x10] sm:$0xff]
    %v343 = vld [vmem:[#allocation11 + $0x18] sm:$0xff]
    %v344 = vld [vmem:[#allocation11 + $0x20] sm:$0xff]
    %v345 = vld [vmem:[#allocation11 + $0x28] sm:$0xff]
    %v346 = vld [vmem:[#allocation11 + $0x30] sm:$0xff]
    %v347 = vld [vmem:[#allocation11 + $0x38] sm:$0xff]
    %v348 = vld [vmem:[#allocation11 + $0x40] sm:$0xff]
    %v349 = vld [vmem:[#allocation11 + $0x48] sm:$0xff]
    %v350 = vld [vmem:[#allocation11 + $0x50] sm:$0xff]
    %v351 = vld [vmem:[#allocation11 + $0x58] sm:$0xff]
    %v352 = vld [vmem:[#allocation11 + $0x60] sm:$0xff]
    %v353 = vld [vmem:[#allocation11 + $0x68] sm:$0xff]
    %v354 = vld [vmem:[#allocation11 + $0x70] sm:$0xff]
    %v355 = vld [vmem:[#allocation11 + $0x78] sm:$0xff]
    %v356 = vld [vmem:[#allocation11 + $0x80] sm:$0xff]
    %v357 = vld [vmem:[#allocation11 + $0x88] sm:$0xff]
    %v358 = vld [vmem:[#allocation11 + $0x90] sm:$0xff]
    %v359 = vld [vmem:[#allocation11 + $0x98] sm:$0xff]
    %v360 = vld [vmem:[#allocation11 + $0xa0] sm:$0xff]
    %v361 = vld [vmem:[#allocation11 + $0xa8] sm:$0xff]
    %v362 = vld [vmem:[#allocation11 + $0xb0] sm:$0xff]
    %v363 = vld [vmem:[#allocation11 + $0xb8] sm:$0xff]
    %v364 = vld [vmem:[#allocation11 + $0xc0] sm:$0xff]
    %v365 = vld [vmem:[#allocation11 + $0xc8] sm:$0xff]
    %v366 = vld [vmem:[#allocation11 + $0xd0] sm:$0xff]
    %v367 = vld [vmem:[#allocation11 + $0xd8] sm:$0xff]
    %v368 = vld [vmem:[#allocation11 + $0xe0] sm:$0xff]
    %v369 = vld [vmem:[#allocation11 + $0xe8] sm:$0xff]
    %v370 = vld [vmem:[#allocation11 + $0xf0] sm:$0xff]
    %v371 = vld [vmem:[#allocation11 + $0xf8] sm:$0xff]
    %v372 = vld [vmem:[#allocation11 + $0x100] sm:$0xff]
    %v373 = vld [vmem:[#allocation11 + $0x108] sm:$0xff]
    %v374 = vld [vmem:[#allocation11 + $0x110] sm:$0xff]
    %v375 = vld [vmem:[#allocation11 + $0x118] sm:$0xff]
    %v376 = vld [vmem:[#allocation11 + $0x120] sm:$0xff]
    %v377 = vld [vmem:[#allocation11 + $0x128] sm:$0xff]
    %v378 = vld [vmem:[#allocation11 + $0x130] sm:$0xff]
    %v379 = vld [vmem:[#allocation11 + $0x138] sm:$0xff]
    %v380 = vld [vmem:[#allocation11 + $0x140] sm:$0xff]
    %v381 = vld [vmem:[#allocation11 + $0x148] sm:$0xff]
    %v382 = vld [vmem:[#allocation11 + $0x150] sm:$0xff]
    %v383 = vld [vmem:[#allocation11 + $0x158] sm:$0xff]
    %v384 = vld [vmem:[#allocation11 + $0x160] sm:$0xff]
    %v385 = vld [vmem:[#allocation11 + $0x168] sm:$0xff]
    %v386 = vld [vmem:[#allocation11 + $0x170] sm:$0xff]
    %v387 = vld [vmem:[#allocation11 + $0x178] sm:$0xff]
    %v388 = vld [vmem:[#allocation11 + $0x180] sm:$0xff]
    %v389 = vld [vmem:[#allocation11 + $0x188] sm:$0xff]
    %v390 = vld [vmem:[#allocation11 + $0x190] sm:$0xff]
    %v391 = vld [vmem:[#allocation11 + $0x198] sm:$0xff]
    %v392 = vld [vmem:[#allocation11 + $0x1a0] sm:$0xff]
    %v393 = vld [vmem:[#allocation11 + $0x1a8] sm:$0xff]
    %v394 = vld [vmem:[#allocation11 + $0x1b0] sm:$0xff]
    %v395 = vld [vmem:[#allocation11 + $0x1b8] sm:$0xff]
    %v396 = vld [vmem:[#allocation11 + $0x1c0] sm:$0xff]
    %v397 = vld [vmem:[#allocation11 + $0x1c8] sm:$0xff]
    %v398 = vld [vmem:[#allocation11 + $0x1d0] sm:$0xff]
    %v399 = vld [vmem:[#allocation11 + $0x1d8] sm:$0xff]
    %v400 = vld [vmem:[#allocation11 + $0x1e0] sm:$0xff]
    %v401 = vld [vmem:[#allocation11 + $0x1e8] sm:$0xff]
    %v402 = vld [vmem:[#allocation11 + $0x1f0] sm:$0xff]
    %v403 = vld [vmem:[#allocation11 + $0x1f8] sm:$0xff]
    %v404 = vld [vmem:[%s10] sm:$0xff]
    %v406 = vperm.slane %v404, 0
    %v407 = vperm.slane %v404, 1
    %v408 = vperm.slane %v404, 2
    %v409 = vperm.slane %v404, 3
    %v410 = vperm.slane %v404, 4
    %v411 = vperm.slane %v404, 5
    %v412 = vperm.slane %v404, 6
    %v413 = vperm.slane %v404, 7
    %v486 = vunpack.c.l.b16 %v340
    %v487 = vunpack.c.h.b16 %v340
    %v488 = vunpack.c.l.b16 %v341
    %v489 = vunpack.c.h.b16 %v341
    %v490 = vunpack.c.l.b16 %v342
    %v491 = vunpack.c.h.b16 %v342
    %v492 = vunpack.c.l.b16 %v343
    %v493 = vunpack.c.h.b16 %v343
    %v494 = vunpack.c.l.b16 %v344
    %v495 = vunpack.c.h.b16 %v344
    %v496 = vunpack.c.l.b16 %v345
    %v497 = vunpack.c.h.b16 %v345
    %v498 = vunpack.c.l.b16 %v346
    %v499 = vunpack.c.h.b16 %v346
    %v500 = vunpack.c.l.b16 %v347
    %v501 = vunpack.c.h.b16 %v347
    %v502 = vunpack.c.l.b16 %v348
    %v503 = vunpack.c.h.b16 %v348
    %v504 = vunpack.c.l.b16 %v349
    %v505 = vunpack.c.h.b16 %v349
    %v506 = vunpack.c.l.b16 %v350
    %v507 = vunpack.c.h.b16 %v350
    %v508 = vunpack.c.l.b16 %v351
    %v509 = vunpack.c.h.b16 %v351
    %v510 = vunpack.c.l.b16 %v352
    %v511 = vunpack.c.h.b16 %v352
    %v512 = vunpack.c.l.b16 %v353
    %v513 = vunpack.c.h.b16 %v353
    %v514 = vunpack.c.l.b16 %v354
    %v515 = vunpack.c.h.b16 %v354
    %v516 = vunpack.c.l.b16 %v355
    %v517 = vunpack.c.h.b16 %v355
    %v518 = vunpack.c.l.b16 %v356
    %v519 = vunpack.c.h.b16 %v356
    %v520 = vunpack.c.l.b16 %v357
    %v521 = vunpack.c.h.b16 %v357
    %v522 = vunpack.c.l.b16 %v358
    %v523 = vunpack.c.h.b16 %v358
    %v524 = vunpack.c.l.b16 %v359
    %v525 = vunpack.c.h.b16 %v359
    %v526 = vunpack.c.l.b16 %v360
    %v527 = vunpack.c.h.b16 %v360
    %v528 = vunpack.c.l.b16 %v361
    %v529 = vunpack.c.h.b16 %v361
    %v530 = vunpack.c.l.b16 %v362
    %v531 = vunpack.c.h.b16 %v362
    %v532 = vunpack.c.l.b16 %v363
    %v533 = vunpack.c.h.b16 %v363
    %v534 = vunpack.c.l.b16 %v364
    %v535 = vunpack.c.h.b16 %v364
    %v536 = vunpack.c.l.b16 %v365
    %v537 = vunpack.c.h.b16 %v365
    %v538 = vunpack.c.l.b16 %v366
    %v539 = vunpack.c.h.b16 %v366
    %v540 = vunpack.c.l.b16 %v367
    %v541 = vunpack.c.h.b16 %v367
    %v542 = vunpack.c.l.b16 %v368
    %v543 = vunpack.c.h.b16 %v368
    %v544 = vunpack.c.l.b16 %v369
    %v545 = vunpack.c.h.b16 %v369
    %v546 = vunpack.c.l.b16 %v370
    %v547 = vunpack.c.h.b16 %v370
    %v548 = vunpack.c.l.b16 %v371
    %v549 = vunpack.c.h.b16 %v371
    %v550 = vunpack.c.l.b16 %v372
    %v551 = vunpack.c.h.b16 %v372
    %v552 = vunpack.c.l.b16 %v373
    %v553 = vunpack.c.h.b16 %v373
    %v554 = vunpack.c.l.b16 %v374
    %v555 = vunpack.c.h.b16 %v374
    %v556 = vunpack.c.l.b16 %v375
    %v557 = vunpack.c.h.b16 %v375
    %v558 = vunpack.c.l.b16 %v376
    %v559 = vunpack.c.h.b16 %v376
    %v560 = vunpack.c.l.b16 %v377
    %v561 = vunpack.c.h.b16 %v377
    %v562 = vunpack.c.l.b16 %v378
    %v563 = vunpack.c.h.b16 %v378
    %v564 = vunpack.c.l.b16 %v379
    %v565 = vunpack.c.h.b16 %v379
    %v566 = vunpack.c.l.b16 %v380
    %v567 = vunpack.c.h.b16 %v380
    %v568 = vunpack.c.l.b16 %v381
    %v569 = vunpack.c.h.b16 %v381
    %v570 = vunpack.c.l.b16 %v382
    %v571 = vunpack.c.h.b16 %v382
    %v572 = vunpack.c.l.b16 %v383
    %v573 = vunpack.c.h.b16 %v383
    %v574 = vunpack.c.l.b16 %v384
    %v575 = vunpack.c.h.b16 %v384
    %v576 = vunpack.c.l.b16 %v385
    %v577 = vunpack.c.h.b16 %v385
    %v578 = vunpack.c.l.b16 %v386
    %v579 = vunpack.c.h.b16 %v386
    %v580 = vunpack.c.l.b16 %v387
    %v581 = vunpack.c.h.b16 %v387
    %v582 = vunpack.c.l.b16 %v388
    %v583 = vunpack.c.h.b16 %v388
    %v584 = vunpack.c.l.b16 %v389
    %v585 = vunpack.c.h.b16 %v389
    %v586 = vunpack.c.l.b16 %v390
    %v587 = vunpack.c.h.b16 %v390
    %v588 = vunpack.c.l.b16 %v391
    %v589 = vunpack.c.h.b16 %v391
    %v590 = vunpack.c.l.b16 %v392
    %v591 = vunpack.c.h.b16 %v392
    %v592 = vunpack.c.l.b16 %v393
    %v593 = vunpack.c.h.b16 %v393
    %v594 = vunpack.c.l.b16 %v394
    %v595 = vunpack.c.h.b16 %v394
    %v596 = vunpack.c.l.b16 %v395
    %v597 = vunpack.c.h.b16 %v395
    %v598 = vunpack.c.l.b16 %v396
    %v599 = vunpack.c.h.b16 %v396
    %v600 = vunpack.c.l.b16 %v397
    %v601 = vunpack.c.h.b16 %v397
    %v602 = vunpack.c.l.b16 %v398
    %v603 = vunpack.c.h.b16 %v398
    %v604 = vunpack.c.l.b16 %v399
    %v605 = vunpack.c.h.b16 %v399
    %v606 = vunpack.c.l.b16 %v400
    %v607 = vunpack.c.h.b16 %v400
    %v608 = vunpack.c.l.b16 %v401
    %v609 = vunpack.c.h.b16 %v401
    %v610 = vunpack.c.l.b16 %v402
    %v611 = vunpack.c.h.b16 %v402
    %v612 = vunpack.c.l.b16 %v403
    %v613 = vunpack.c.h.b16 %v403
    %v614 = vpack.c.b16 %v494, %v486
    %v615 = vpack.c.b16 %v495, %v487
    %v616 = vpack.c.b16 %v496, %v488
    %v617 = vpack.c.b16 %v497, %v489
    %v618 = vpack.c.b16 %v498, %v490
    %v619 = vpack.c.b16 %v499, %v491
    %v620 = vpack.c.b16 %v500, %v492
    %v621 = vpack.c.b16 %v501, %v493
    %v622 = vpack.c.b16 %v510, %v502
    %v623 = vpack.c.b16 %v511, %v503
    %v624 = vpack.c.b16 %v512, %v504
    %v625 = vpack.c.b16 %v513, %v505
    %v626 = vpack.c.b16 %v514, %v506
    %v627 = vpack.c.b16 %v515, %v507
    %v628 = vpack.c.b16 %v516, %v508
    %v629 = vpack.c.b16 %v517, %v509
    %v630 = vpack.c.b16 %v526, %v518
    %v631 = vpack.c.b16 %v527, %v519
    %v632 = vpack.c.b16 %v528, %v520
    %v633 = vpack.c.b16 %v529, %v521
    %v634 = vpack.c.b16 %v530, %v522
    %v635 = vpack.c.b16 %v531, %v523
    %v636 = vpack.c.b16 %v532, %v524
    %v637 = vpack.c.b16 %v533, %v525
    %v638 = vpack.c.b16 %v542, %v534
    %v639 = vpack.c.b16 %v543, %v535
    %v640 = vpack.c.b16 %v544, %v536
    %v641 = vpack.c.b16 %v545, %v537
    %v642 = vpack.c.b16 %v546, %v538
    %v643 = vpack.c.b16 %v547, %v539
    %v644 = vpack.c.b16 %v548, %v540
    %v645 = vpack.c.b16 %v549, %v541
    %v646 = vpack.c.b16 %v558, %v550
    %v647 = vpack.c.b16 %v559, %v551
    %v648 = vpack.c.b16 %v560, %v552
    %v649 = vpack.c.b16 %v561, %v553
    %v650 = vpack.c.b16 %v562, %v554
    %v651 = vpack.c.b16 %v563, %v555
    %v652 = vpack.c.b16 %v564, %v556
    %v653 = vpack.c.b16 %v565, %v557
    %v654 = vpack.c.b16 %v574, %v566
    %v655 = vpack.c.b16 %v575, %v567
    %v656 = vpack.c.b16 %v576, %v568
    %v657 = vpack.c.b16 %v577, %v569
    %v658 = vpack.c.b16 %v578, %v570
    %v659 = vpack.c.b16 %v579, %v571
    %v660 = vpack.c.b16 %v580, %v572
    %v661 = vpack.c.b16 %v581, %v573
    %v662 = vpack.c.b16 %v590, %v582
    %v663 = vpack.c.b16 %v591, %v583
    %v664 = vpack.c.b16 %v592, %v584
    %v665 = vpack.c.b16 %v593, %v585
    %v666 = vpack.c.b16 %v594, %v586
    %v667 = vpack.c.b16 %v595, %v587
    %v668 = vpack.c.b16 %v596, %v588
    %v669 = vpack.c.b16 %v597, %v589
    %v670 = vpack.c.b16 %v606, %v598
    %v671 = vpack.c.b16 %v607, %v599
    %v672 = vpack.c.b16 %v608, %v600
    %v673 = vpack.c.b16 %v609, %v601
    %v674 = vpack.c.b16 %v610, %v602
    %v675 = vpack.c.b16 %v611, %v603
    %v676 = vpack.c.b16 %v612, %v604
    %v677 = vpack.c.b16 %v613, %v605
    %742 = vmatpush.bf16.msra.mxu0 %v670
    %743 = vmatpush.bf16.msra.mxu0 %v662
    %744 = vmatpush.bf16.msra.mxu0 %v654
    %745 = vmatpush.bf16.msra.mxu0 %v646
    %746 = vmatpush.bf16.msra.mxu0 %v638
    %747 = vmatpush.bf16.msra.mxu0 %v630
    %748 = vmatpush.bf16.msra.mxu0 %v622
    %749 = vmatpush.bf16.msra.mxu0 %v614
    %750 = vmatmul.bf16.gmra.mxu0 %v339
    %v751 = vpop.f32.mrf.mxu0
    %v752 = vadd.f32 %v406, %v751
    %v753 = vpop.f32.mrf.mxu0
    %v754 = vadd.f32 %v406, %v753
    %755 = vdwg.mxu0
    %756 = vmatpush.bf16.msra.mxu0 %v671
    %757 = vmatpush.bf16.msra.mxu0 %v663
    %758 = vmatpush.bf16.msra.mxu0 %v655
    %759 = vmatpush.bf16.msra.mxu0 %v647
    %760 = vmatpush.bf16.msra.mxu0 %v639
    %761 = vmatpush.bf16.msra.mxu0 %v631
    %762 = vmatpush.bf16.msra.mxu0 %v623
    %763 = vmatpush.bf16.msra.mxu0 %v615
    %764 = vmatmul.bf16.gmra.mxu0 %v339
    %v765 = vpop.f32.mrf.mxu0
    %v766 = vadd.f32 %v407, %v765
    %v767 = vpop.f32.mrf.mxu0
    %v768 = vadd.f32 %v407, %v767
    %769 = vdwg.mxu0
    %770 = vmatpush.bf16.msra.mxu0 %v672
    %771 = vmatpush.bf16.msra.mxu0 %v664
    %772 = vmatpush.bf16.msra.mxu0 %v656
    %773 = vmatpush.bf16.msra.mxu0 %v648
    %774 = vmatpush.bf16.msra.mxu0 %v640
    %775 = vmatpush.bf16.msra.mxu0 %v632
    %776 = vmatpush.bf16.msra.mxu0 %v624
    %777 = vmatpush.bf16.msra.mxu0 %v616
    %778 = vmatmul.bf16.gmra.mxu0 %v339
    %v779 = vpop.f32.mrf.mxu0
    %v780 = vadd.f32 %v408, %v779
    %v781 = vpop.f32.mrf.mxu0
    %v782 = vadd.f32 %v408, %v781
    %783 = vdwg.mxu0
    %784 = vmatpush.bf16.msra.mxu0 %v673
    %785 = vmatpush.bf16.msra.mxu0 %v665
    %786 = vmatpush.bf16.msra.mxu0 %v657
    %787 = vmatpush.bf16.msra.mxu0 %v649
    %788 = vmatpush.bf16.msra.mxu0 %v641
    %789 = vmatpush.bf16.msra.mxu0 %v633
    %790 = vmatpush.bf16.msra.mxu0 %v625
    %791 = vmatpush.bf16.msra.mxu0 %v617
    %792 = vmatmul.bf16.gmra.mxu0 %v339
    %v793 = vpop.f32.mrf.mxu0
    %v794 = vadd.f32 %v409, %v793
    %v795 = vpop.f32.mrf.mxu0
    %v796 = vadd.f32 %v409, %v795
    %797 = vdwg.mxu0
    %798 = vmatpush.bf16.msra.mxu0 %v674
    %799 = vmatpush.bf16.msra.mxu0 %v666
    %800 = vmatpush.bf16.msra.mxu0 %v658
    %801 = vmatpush.bf16.msra.mxu0 %v650
    %802 = vmatpush.bf16.msra.mxu0 %v642
    %803 = vmatpush.bf16.msra.mxu0 %v634
    %804 = vmatpush.bf16.msra.mxu0 %v626
    %805 = vmatpush.bf16.msra.mxu0 %v618
    %806 = vmatmul.bf16.gmra.mxu0 %v339
    %v807 = vpop.f32.mrf.mxu0
    %v808 = vadd.f32 %v410, %v807
    %v809 = vpop.f32.mrf.mxu0
    %v810 = vadd.f32 %v410, %v809
    %811 = vdwg.mxu0
    %812 = vmatpush.bf16.msra.mxu0 %v675
    %813 = vmatpush.bf16.msra.mxu0 %v667
    %814 = vmatpush.bf16.msra.mxu0 %v659
    %815 = vmatpush.bf16.msra.mxu0 %v651
    %816 = vmatpush.bf16.msra.mxu0 %v643
    %817 = vmatpush.bf16.msra.mxu0 %v635
    %818 = vmatpush.bf16.msra.mxu0 %v627
    %819 = vmatpush.bf16.msra.mxu0 %v619
    %820 = vmatmul.bf16.gmra.mxu0 %v339
    %v821 = vpop.f32.mrf.mxu0
    %v822 = vadd.f32 %v411, %v821
    %v823 = vpop.f32.mrf.mxu0
    %v824 = vadd.f32 %v411, %v823
    %825 = vdwg.mxu0
    %826 = vmatpush.bf16.msra.mxu0 %v676
    %827 = vmatpush.bf16.msra.mxu0 %v668
    %828 = vmatpush.bf16.msra.mxu0 %v660
    %829 = vmatpush.bf16.msra.mxu0 %v652
    %830 = vmatpush.bf16.msra.mxu0 %v644
    %831 = vmatpush.bf16.msra.mxu0 %v636
    %832 = vmatpush.bf16.msra.mxu0 %v628
    %833 = vmatpush.bf16.msra.mxu0 %v620
    %834 = vmatmul.bf16.gmra.mxu0 %v339
    %v835 = vpop.f32.mrf.mxu0
    %v836 = vadd.f32 %v412, %v835
    %v837 = vpop.f32.mrf.mxu0
    %v838 = vadd.f32 %v412, %v837
    %839 = vdwg.mxu0
    %840 = vmatpush.bf16.msra.mxu0 %v677
    %841 = vmatpush.bf16.msra.mxu0 %v669
    %842 = vmatpush.bf16.msra.mxu0 %v661
    %843 = vmatpush.bf16.msra.mxu0 %v653
    %844 = vmatpush.bf16.msra.mxu0 %v645
    %845 = vmatpush.bf16.msra.mxu0 %v637
    %846 = vmatpush.bf16.msra.mxu0 %v629
    %847 = vmatpush.bf16.msra.mxu0 %v621
    %848 = vmatmul.bf16.gmra.mxu0 %v339
    %v849 = vpop.f32.mrf.mxu0
    %v850 = vadd.f32 %v413, %v849
    %v851 = vpop.f32.mrf.mxu0
    %v852 = vadd.f32 %v413, %v851
    %853 = vdwg.mxu0
    %v854 = vmax.f32 %v752, 0.0
    %v855 = vmax.f32 %v766, 0.0
    %v856 = vmax.f32 %v780, 0.0
    %v857 = vmax.f32 %v794, 0.0
    %v858 = vmax.f32 %v808, 0.0
    %v859 = vmax.f32 %v822, 0.0
    %v860 = vmax.f32 %v836, 0.0
    %v861 = vmax.f32 %v850, 0.0
    %v862 = vmax.f32 %v754, 0.0
    %v863 = vmax.f32 %v768, 0.0
    %v864 = vmax.f32 %v782, 0.0
    %v865 = vmax.f32 %v796, 0.0
    %v866 = vmax.f32 %v810, 0.0
    %v867 = vmax.f32 %v824, 0.0
    %v868 = vmax.f32 %v838, 0.0
    %v869 = vmax.f32 %v852, 0.0
    %v870 = vmax.f32 %v854, %v862
    %v871 = vrot.slane %v870, 4
    %v872 = vmax.f32 %v870, %v871
    %v873 = vrot.slane %v872, 2
    %v874 = vmax.f32 %v872, %v873
    %v875 = vrot.slane %v874, 1
    %v876 = vmax.f32 %v874, %v875
    %v877 = vmax.f32 %v855, %v863
    %v878 = vrot.slane %v877, 4
    %v879 = vmax.f32 %v877, %v878
    %v880 = vrot.slane %v879, 2
    %v881 = vmax.f32 %v879, %v880
    %v882 = vrot.slane %v881, 1
    %v883 = vmax.f32 %v881, %v882
    %v884 = vmax.f32 %v856, %v864
    %v885 = vrot.slane %v884, 4
    %v886 = vmax.f32 %v884, %v885
    %v887 = vrot.slane %v886, 2
    %v888 = vmax.f32 %v886, %v887
    %v889 = vrot.slane %v888, 1
    %v890 = vmax.f32 %v888, %v889
    %v891 = vmax.f32 %v857, %v865
    %v892 = vrot.slane %v891, 4
    %v893 = vmax.f32 %v891, %v892
    %v894 = vrot.slane %v893, 2
    %v895 = vmax.f32 %v893, %v894
    %v896 = vrot.slane %v895, 1
    %v897 = vmax.f32 %v895, %v896
    %v898 = vmax.f32 %v858, %v866
    %v899 = vrot.slane %v898, 4
    %v900 = vmax.f32 %v898, %v899
    %v901 = vrot.slane %v900, 2
    %v902 = vmax.f32 %v900, %v901
    %v903 = vrot.slane %v902, 1
    %v904 = vmax.f32 %v902, %v903
    %v905 = vmax.f32 %v859, %v867
    %v906 = vrot.slane %v905, 4
    %v907 = vmax.f32 %v905, %v906
    %v908 = vrot.slane %v907, 2
    %v909 = vmax.f32 %v907, %v908
    %v910 = vrot.slane %v909, 1
    %v911 = vmax.f32 %v909, %v910
    %v912 = vmax.f32 %v860, %v868
    %v913 = vrot.slane %v912, 4
    %v914 = vmax.f32 %v912, %v913
    %v915 = vrot.slane %v914, 2
    %v916 = vmax.f32 %v914, %v915
    %v917 = vrot.slane %v916, 1
    %v918 = vmax.f32 %v916, %v917
    %v919 = vmax.f32 %v861, %v869
    %v920 = vrot.slane %v919, 4
    %v921 = vmax.f32 %v919, %v920
    %v922 = vrot.slane %v921, 2
    %v923 = vmax.f32 %v921, %v922
    %v924 = vrot.slane %v923, 1
    %v925 = vmax.f32 %v923, %v924
    %v926 = vld [vmem:[#allocation2] ss:$2 sm:$0xff]
    %v935 = vrot.slane %v883, 7
    %v936 = vrot.slane %v890, 6
    %v937 = vrot.slane %v897, 5
    %v938 = vrot.slane %v904, 4
    %v939 = vrot.slane %v911, 3
    %v940 = vrot.slane %v918, 2
    %v941 = vrot.slane %v925, 1
    %vm942 = vcmask 1040384
    %v943 = vsel %vm942, %v876, %v935
    %vm944 = vcmask 1042434
    %v945 = vsel %vm944, %v936, %v937
    %vm946 = vcmask 1041408
    %v947 = vsel %vm946, %v943, %v945
    %vm948 = vcmask 1044484
    %v949 = vsel %vm948, %v938, %v939
    %vm950 = vcmask 1046534
    %v951 = vsel %vm950, %v940, %v941
    %vm952 = vcmask 1045508
    %v953 = vsel %vm952, %v949, %v951
    %vm954 = vcmask 1043456
    %v955 = vsel %vm954, %v947, %v953
    %v957 = vmax.f32 %v926, %v955
    %958 = vst [vmem:[#allocation2] ss:$2 sm:$0xff] %v957
    %s959 = scalar_lea.vmem %s0, 16
    %v960 = vld [vmem:[%s959] sm:$0xff]
    %v961 = vld [vmem:[%s959 + $0x8] sm:$0xff]
    %963 = vset.pattern.permute.xlu0 0
    %964 = vperm.xlu0 %963, %v960
    %v965 = vpop.permute.xlu0 %964
    %968 = vset.pattern.permute.xlu0 0
    %969 = vperm.xlu0 %968, %v961
    %v970 = vpop.permute.xlu0 %969
    %v972 = vmul.f32 %v965, %v134
    %v973 = vmul.f32 %v970, %v134
    %974 = vset.pattern.permute.xlu0 1
    %975 = vperm.xlu0 %974, %v960
    %v976 = vpop.permute.xlu0 %975
    %978 = vset.pattern.permute.xlu0 1
    %979 = vperm.xlu0 %978, %v961
    %v980 = vpop.permute.xlu0 %979
    %v982 = vmul.f32 %v976, %v145
    %v983 = vmul.f32 %v980, %v145
    %v984 = vadd.f32 %v972, %v982
    %v985 = vadd.f32 %v973, %v983
    %986 = vset.pattern.permute.xlu0 2
    %987 = vperm.xlu0 %986, %v960
    %v988 = vpop.permute.xlu0 %987
    %990 = vset.pattern.permute.xlu0 2
    %991 = vperm.xlu0 %990, %v961
    %v992 = vpop.permute.xlu0 %991
    %v994 = vmul.f32 %v988, %v158
    %v995 = vmul.f32 %v992, %v158
    %v996 = vadd.f32 %v984, %v994
    %v997 = vadd.f32 %v985, %v995
    %v998 = vadd.f32 %v996, %v164
    %v999 = vadd.f32 %v997, %v164
    %v1000 = vmax.f32 %v998, 0.0
    %v1001 = vmax.f32 %v999, 0.0
    %v1002 = vpack.c.bf16 %v1001, %v1000
    %v1003 = vld [vmem:[%s3] sm:$0xf]
    %v1004 = vld [vmem:[%s3 + $0x4] sm:$0xf]
    %v1005 = vld [vmem:[%s3 + $0x8] sm:$0xf]
    %v1006 = vld [vmem:[%s3 + $0xc] sm:$0xf]
    %v1007 = vld [vmem:[%s3 + $0x10] sm:$0xf]
    %v1008 = vld [vmem:[%s3 + $0x14] sm:$0xf]
    %v1009 = vld [vmem:[%s3 + $0x18] sm:$0xf]
    %v1010 = vld [vmem:[%s3 + $0x1c] sm:$0xf]
    %v1011 = vld [vmem:[%s4] sm:$0x1]
    %v1013 = vperm.slane %v1011, 0
    %v1023 = vunpack.c.l.b16 %v1003
    %v1024 = vunpack.c.l.b16 %v1004
    %v1025 = vunpack.c.l.b16 %v1005
    %v1026 = vunpack.c.l.b16 %v1006
    %v1027 = vunpack.c.l.b16 %v1007
    %v1028 = vunpack.c.l.b16 %v1008
    %v1029 = vunpack.c.l.b16 %v1009
    %v1030 = vunpack.c.l.b16 %v1010
    %v1031 = vpack.c.b16 %v1024, %v1023
    %v1032 = vpack.c.b16 %v1026, %v1025
    %v1033 = vpack.c.b16 %v1028, %v1027
    %v1034 = vpack.c.b16 %v1030, %v1029
    %v1040 = vsel %vm207, %v1002, 0
    %1042 = vmatpush.bf16.msra.mxu0 0
    %1043 = vmatpush.bf16.msra.mxu0 0
    %1044 = vmatpush.bf16.msra.mxu0 0
    %1045 = vmatpush.bf16.msra.mxu0 0
    %1046 = vmatpush.bf16.msra.mxu0 %v1034
    %1047 = vmatpush.bf16.msra.mxu0 %v1033
    %1048 = vmatpush.bf16.msra.mxu0 %v1032
    %1049 = vmatpush.bf16.msra.mxu0 %v1031
    %1050 = vmatmul.bf16.gmra.mxu0 %v1040
    %v1051 = vpop.f32.mrf.mxu0
    %v1052 = vadd.f32 %v1013, %v1051
    %v1053 = vpop.f32.mrf.mxu0
    %v1054 = vadd.f32 %v1013, %v1053
    %1055 = vdwg.mxu0
    %v1056 = vmax.f32 %v1052, 0.0
    %v1057 = vmax.f32 %v1054, 0.0
    %v1058 = vpack.c.bf16 %v1057, %v1056
    %v1059 = vld [vmem:[#allocation8] sm:$0xf]
    %v1060 = vld [vmem:[#allocation8 + $0x4] sm:$0xf]
    %v1061 = vld [vmem:[#allocation8 + $0x8] sm:$0xf]
    %v1062 = vld [vmem:[#allocation8 + $0xc] sm:$0xf]
    %v1063 = vld [vmem:[#allocation8 + $0x10] sm:$0xf]
    %v1064 = vld [vmem:[#allocation8 + $0x14] sm:$0xf]
    %v1065 = vld [vmem:[#allocation8 + $0x18] sm:$0xf]
    %v1066 = vld [vmem:[#allocation8 + $0x1c] sm:$0xf]
    %v1067 = vld [vmem:[%s6] sm:$0x1]
    %v1069 = vperm.slane %v1067, 0
    %v1079 = vunpack.c.l.b16 %v1059
    %v1080 = vunpack.c.l.b16 %v1060
    %v1081 = vunpack.c.l.b16 %v1061
    %v1082 = vunpack.c.l.b16 %v1062
    %v1083 = vunpack.c.l.b16 %v1063
    %v1084 = vunpack.c.l.b16 %v1064
    %v1085 = vunpack.c.l.b16 %v1065
    %v1086 = vunpack.c.l.b16 %v1066
    %v1087 = vpack.c.b16 %v1080, %v1079
    %v1088 = vpack.c.b16 %v1082, %v1081
    %v1089 = vpack.c.b16 %v1084, %v1083
    %v1090 = vpack.c.b16 %v1086, %v1085
    %v1096 = vsel %vm207, %v1058, 0
    %1098 = vmatpush.bf16.msra.mxu0 0
    %1099 = vmatpush.bf16.msra.mxu0 0
    %1100 = vmatpush.bf16.msra.mxu0 0
    %1101 = vmatpush.bf16.msra.mxu0 0
    %1102 = vmatpush.bf16.msra.mxu0 %v1090
    %1103 = vmatpush.bf16.msra.mxu0 %v1089
    %1104 = vmatpush.bf16.msra.mxu0 %v1088
    %1105 = vmatpush.bf16.msra.mxu0 %v1087
    %1106 = vmatmul.bf16.gmra.mxu0 %v1096
    %v1107 = vpop.f32.mrf.mxu0
    %v1108 = vadd.f32 %v1069, %v1107
    %v1109 = vpop.f32.mrf.mxu0
    %v1110 = vadd.f32 %v1069, %v1109
    %1111 = vdwg.mxu0
    %v1112 = vmax.f32 %v1108, 0.0
    %v1113 = vmax.f32 %v1110, 0.0
    %v1114 = vpack.c.bf16 %v1113, %v1112
    %v1115 = vld [vmem:[#allocation9] sm:$0xf]
    %v1116 = vld [vmem:[#allocation9 + $0x4] sm:$0xf]
    %v1117 = vld [vmem:[#allocation9 + $0x8] sm:$0xf]
    %v1118 = vld [vmem:[#allocation9 + $0xc] sm:$0xf]
    %v1119 = vld [vmem:[#allocation9 + $0x10] sm:$0xf]
    %v1120 = vld [vmem:[#allocation9 + $0x14] sm:$0xf]
    %v1121 = vld [vmem:[#allocation9 + $0x18] sm:$0xf]
    %v1122 = vld [vmem:[#allocation9 + $0x1c] sm:$0xf]
    %v1123 = vld [vmem:[%s8] sm:$0x1]
    %v1125 = vperm.slane %v1123, 0
    %v1135 = vunpack.c.l.b16 %v1115
    %v1136 = vunpack.c.l.b16 %v1116
    %v1137 = vunpack.c.l.b16 %v1117
    %v1138 = vunpack.c.l.b16 %v1118
    %v1139 = vunpack.c.l.b16 %v1119
    %v1140 = vunpack.c.l.b16 %v1120
    %v1141 = vunpack.c.l.b16 %v1121
    %v1142 = vunpack.c.l.b16 %v1122
    %v1143 = vpack.c.b16 %v1136, %v1135
    %v1144 = vpack.c.b16 %v1138, %v1137
    %v1145 = vpack.c.b16 %v1140, %v1139
    %v1146 = vpack.c.b16 %v1142, %v1141
    %v1152 = vsel %vm207, %v1114, 0
    %1154 = vmatpush.bf16.msra.mxu0 0
    %1155 = vmatpush.bf16.msra.mxu0 0
    %1156 = vmatpush.bf16.msra.mxu0 0
    %1157 = vmatpush.bf16.msra.mxu0 0
    %1158 = vmatpush.bf16.msra.mxu0 %v1146
    %1159 = vmatpush.bf16.msra.mxu0 %v1145
    %1160 = vmatpush.bf16.msra.mxu0 %v1144
    %1161 = vmatpush.bf16.msra.mxu0 %v1143
    %1162 = vmatmul.bf16.gmra.mxu0 %v1152
    %v1163 = vpop.f32.mrf.mxu0
    %v1164 = vadd.f32 %v1125, %v1163
    %v1165 = vpop.f32.mrf.mxu0
    %v1166 = vadd.f32 %v1125, %v1165
    %1167 = vdwg.mxu0
    %v1168 = vmax.f32 %v1164, 0.0
    %v1169 = vmax.f32 %v1166, 0.0
    %v1170 = vpack.c.bf16 %v1169, %v1168
    %v1171 = vld [vmem:[#allocation11] sm:$0xff]
    %v1172 = vld [vmem:[#allocation11 + $0x8] sm:$0xff]
    %v1173 = vld [vmem:[#allocation11 + $0x10] sm:$0xff]
    %v1174 = vld [vmem:[#allocation11 + $0x18] sm:$0xff]
    %v1175 = vld [vmem:[#allocation11 + $0x20] sm:$0xff]
    %v1176 = vld [vmem:[#allocation11 + $0x28] sm:$0xff]
    %v1177 = vld [vmem:[#allocation11 + $0x30] sm:$0xff]
    %v1178 = vld [vmem:[#allocation11 + $0x38] sm:$0xff]
    %v1179 = vld [vmem:[#allocation11 + $0x40] sm:$0xff]
    %v1180 = vld [vmem:[#allocation11 + $0x48] sm:$0xff]
    %v1181 = vld [vmem:[#allocation11 + $0x50] sm:$0xff]
    %v1182 = vld [vmem:[#allocation11 + $0x58] sm:$0xff]
    %v1183 = vld [vmem:[#allocation11 + $0x60] sm:$0xff]
    %v1184 = vld [vmem:[#allocation11 + $0x68] sm:$0xff]
    %v1185 = vld [vmem:[#allocation11 + $0x70] sm:$0xff]
    %v1186 = vld [vmem:[#allocation11 + $0x78] sm:$0xff]
    %v1187 = vld [vmem:[#allocation11 + $0x80] sm:$0xff]
    %v1188 = vld [vmem:[#allocation11 + $0x88] sm:$0xff]
    %v1189 = vld [vmem:[#allocation11 + $0x90] sm:$0xff]
    %v1190 = vld [vmem:[#allocation11 + $0x98] sm:$0xff]
    %v1191 = vld [vmem:[#allocation11 + $0xa0] sm:$0xff]
    %v1192 = vld [vmem:[#allocation11 + $0xa8] sm:$0xff]
    %v1193 = vld [vmem:[#allocation11 + $0xb0] sm:$0xff]
    %v1194 = vld [vmem:[#allocation11 + $0xb8] sm:$0xff]
    %v1195 = vld [vmem:[#allocation11 + $0xc0] sm:$0xff]
    %v1196 = vld [vmem:[#allocation11 + $0xc8] sm:$0xff]
    %v1197 = vld [vmem:[#allocation11 + $0xd0] sm:$0xff]
    %v1198 = vld [vmem:[#allocation11 + $0xd8] sm:$0xff]
    %v1199 = vld [vmem:[#allocation11 + $0xe0] sm:$0xff]
    %v1200 = vld [vmem:[#allocation11 + $0xe8] sm:$0xff]
    %v1201 = vld [vmem:[#allocation11 + $0xf0] sm:$0xff]
    %v1202 = vld [vmem:[#allocation11 + $0xf8] sm:$0xff]
    %v1203 = vld [vmem:[#allocation11 + $0x100] sm:$0xff]
    %v1204 = vld [vmem:[#allocation11 + $0x108] sm:$0xff]
    %v1205 = vld [vmem:[#allocation11 + $0x110] sm:$0xff]
    %v1206 = vld [vmem:[#allocation11 + $0x118] sm:$0xff]
    %v1207 = vld [vmem:[#allocation11 + $0x120] sm:$0xff]
    %v1208 = vld [vmem:[#allocation11 + $0x128] sm:$0xff]
    %v1209 = vld [vmem:[#allocation11 + $0x130] sm:$0xff]
    %v1210 = vld [vmem:[#allocation11 + $0x138] sm:$0xff]
    %v1211 = vld [vmem:[#allocation11 + $0x140] sm:$0xff]
    %v1212 = vld [vmem:[#allocation11 + $0x148] sm:$0xff]
    %v1213 = vld [vmem:[#allocation11 + $0x150] sm:$0xff]
    %v1214 = vld [vmem:[#allocation11 + $0x158] sm:$0xff]
    %v1215 = vld [vmem:[#allocation11 + $0x160] sm:$0xff]
    %v1216 = vld [vmem:[#allocation11 + $0x168] sm:$0xff]
    %v1217 = vld [vmem:[#allocation11 + $0x170] sm:$0xff]
    %v1218 = vld [vmem:[#allocation11 + $0x178] sm:$0xff]
    %v1219 = vld [vmem:[#allocation11 + $0x180] sm:$0xff]
    %v1220 = vld [vmem:[#allocation11 + $0x188] sm:$0xff]
    %v1221 = vld [vmem:[#allocation11 + $0x190] sm:$0xff]
    %v1222 = vld [vmem:[#allocation11 + $0x198] sm:$0xff]
    %v1223 = vld [vmem:[#allocation11 + $0x1a0] sm:$0xff]
    %v1224 = vld [vmem:[#allocation11 + $0x1a8] sm:$0xff]
    %v1225 = vld [vmem:[#allocation11 + $0x1b0] sm:$0xff]
    %v1226 = vld [vmem:[#allocation11 + $0x1b8] sm:$0xff]
    %v1227 = vld [vmem:[#allocation11 + $0x1c0] sm:$0xff]
    %v1228 = vld [vmem:[#allocation11 + $0x1c8] sm:$0xff]
    %v1229 = vld [vmem:[#allocation11 + $0x1d0] sm:$0xff]
    %v1230 = vld [vmem:[#allocation11 + $0x1d8] sm:$0xff]
    %v1231 = vld [vmem:[#allocation11 + $0x1e0] sm:$0xff]
    %v1232 = vld [vmem:[#allocation11 + $0x1e8] sm:$0xff]
    %v1233 = vld [vmem:[#allocation11 + $0x1f0] sm:$0xff]
    %v1234 = vld [vmem:[#allocation11 + $0x1f8] sm:$0xff]
    %v1235 = vld [vmem:[%s10] sm:$0xff]
    %v1237 = vperm.slane %v1235, 0
    %v1238 = vperm.slane %v1235, 1
    %v1239 = vperm.slane %v1235, 2
    %v1240 = vperm.slane %v1235, 3
    %v1241 = vperm.slane %v1235, 4
    %v1242 = vperm.slane %v1235, 5
    %v1243 = vperm.slane %v1235, 6
    %v1244 = vperm.slane %v1235, 7
    %v1317 = vunpack.c.l.b16 %v1171
    %v1318 = vunpack.c.h.b16 %v1171
    %v1319 = vunpack.c.l.b16 %v1172
    %v1320 = vunpack.c.h.b16 %v1172
    %v1321 = vunpack.c.l.b16 %v1173
    %v1322 = vunpack.c.h.b16 %v1173
    %v1323 = vunpack.c.l.b16 %v1174
    %v1324 = vunpack.c.h.b16 %v1174
    %v1325 = vunpack.c.l.b16 %v1175
    %v1326 = vunpack.c.h.b16 %v1175
    %v1327 = vunpack.c.l.b16 %v1176
    %v1328 = vunpack.c.h.b16 %v1176
    %v1329 = vunpack.c.l.b16 %v1177
    %v1330 = vunpack.c.h.b16 %v1177
    %v1331 = vunpack.c.l.b16 %v1178
    %v1332 = vunpack.c.h.b16 %v1178
    %v1333 = vunpack.c.l.b16 %v1179
    %v1334 = vunpack.c.h.b16 %v1179
    %v1335 = vunpack.c.l.b16 %v1180
    %v1336 = vunpack.c.h.b16 %v1180
    %v1337 = vunpack.c.l.b16 %v1181
    %v1338 = vunpack.c.h.b16 %v1181
    %v1339 = vunpack.c.l.b16 %v1182
    %v1340 = vunpack.c.h.b16 %v1182
    %v1341 = vunpack.c.l.b16 %v1183
    %v1342 = vunpack.c.h.b16 %v1183
    %v1343 = vunpack.c.l.b16 %v1184
    %v1344 = vunpack.c.h.b16 %v1184
    %v1345 = vunpack.c.l.b16 %v1185
    %v1346 = vunpack.c.h.b16 %v1185
    %v1347 = vunpack.c.l.b16 %v1186
    %v1348 = vunpack.c.h.b16 %v1186
    %v1349 = vunpack.c.l.b16 %v1187
    %v1350 = vunpack.c.h.b16 %v1187
    %v1351 = vunpack.c.l.b16 %v1188
    %v1352 = vunpack.c.h.b16 %v1188
    %v1353 = vunpack.c.l.b16 %v1189
    %v1354 = vunpack.c.h.b16 %v1189
    %v1355 = vunpack.c.l.b16 %v1190
    %v1356 = vunpack.c.h.b16 %v1190
    %v1357 = vunpack.c.l.b16 %v1191
    %v1358 = vunpack.c.h.b16 %v1191
    %v1359 = vunpack.c.l.b16 %v1192
    %v1360 = vunpack.c.h.b16 %v1192
    %v1361 = vunpack.c.l.b16 %v1193
    %v1362 = vunpack.c.h.b16 %v1193
    %v1363 = vunpack.c.l.b16 %v1194
    %v1364 = vunpack.c.h.b16 %v1194
    %v1365 = vunpack.c.l.b16 %v1195
    %v1366 = vunpack.c.h.b16 %v1195
    %v1367 = vunpack.c.l.b16 %v1196
    %v1368 = vunpack.c.h.b16 %v1196
    %v1369 = vunpack.c.l.b16 %v1197
    %v1370 = vunpack.c.h.b16 %v1197
    %v1371 = vunpack.c.l.b16 %v1198
    %v1372 = vunpack.c.h.b16 %v1198
    %v1373 = vunpack.c.l.b16 %v1199
    %v1374 = vunpack.c.h.b16 %v1199
    %v1375 = vunpack.c.l.b16 %v1200
    %v1376 = vunpack.c.h.b16 %v1200
    %v1377 = vunpack.c.l.b16 %v1201
    %v1378 = vunpack.c.h.b16 %v1201
    %v1379 = vunpack.c.l.b16 %v1202
    %v1380 = vunpack.c.h.b16 %v1202
    %v1381 = vunpack.c.l.b16 %v1203
    %v1382 = vunpack.c.h.b16 %v1203
    %v1383 = vunpack.c.l.b16 %v1204
    %v1384 = vunpack.c.h.b16 %v1204
    %v1385 = vunpack.c.l.b16 %v1205
    %v1386 = vunpack.c.h.b16 %v1205
    %v1387 = vunpack.c.l.b16 %v1206
    %v1388 = vunpack.c.h.b16 %v1206
    %v1389 = vunpack.c.l.b16 %v1207
    %v1390 = vunpack.c.h.b16 %v1207
    %v1391 = vunpack.c.l.b16 %v1208
    %v1392 = vunpack.c.h.b16 %v1208
    %v1393 = vunpack.c.l.b16 %v1209
    %v1394 = vunpack.c.h.b16 %v1209
    %v1395 = vunpack.c.l.b16 %v1210
    %v1396 = vunpack.c.h.b16 %v1210
    %v1397 = vunpack.c.l.b16 %v1211
    %v1398 = vunpack.c.h.b16 %v1211
    %v1399 = vunpack.c.l.b16 %v1212
    %v1400 = vunpack.c.h.b16 %v1212
    %v1401 = vunpack.c.l.b16 %v1213
    %v1402 = vunpack.c.h.b16 %v1213
    %v1403 = vunpack.c.l.b16 %v1214
    %v1404 = vunpack.c.h.b16 %v1214
    %v1405 = vunpack.c.l.b16 %v1215
    %v1406 = vunpack.c.h.b16 %v1215
    %v1407 = vunpack.c.l.b16 %v1216
    %v1408 = vunpack.c.h.b16 %v1216
    %v1409 = vunpack.c.l.b16 %v1217
    %v1410 = vunpack.c.h.b16 %v1217
    %v1411 = vunpack.c.l.b16 %v1218
    %v1412 = vunpack.c.h.b16 %v1218
    %v1413 = vunpack.c.l.b16 %v1219
    %v1414 = vunpack.c.h.b16 %v1219
    %v1415 = vunpack.c.l.b16 %v1220
    %v1416 = vunpack.c.h.b16 %v1220
    %v1417 = vunpack.c.l.b16 %v1221
    %v1418 = vunpack.c.h.b16 %v1221
    %v1419 = vunpack.c.l.b16 %v1222
    %v1420 = vunpack.c.h.b16 %v1222
    %v1421 = vunpack.c.l.b16 %v1223
    %v1422 = vunpack.c.h.b16 %v1223
    %v1423 = vunpack.c.l.b16 %v1224
    %v1424 = vunpack.c.h.b16 %v1224
    %v1425 = vunpack.c.l.b16 %v1225
    %v1426 = vunpack.c.h.b16 %v1225
    %v1427 = vunpack.c.l.b16 %v1226
    %v1428 = vunpack.c.h.b16 %v1226
    %v1429 = vunpack.c.l.b16 %v1227
    %v1430 = vunpack.c.h.b16 %v1227
    %v1431 = vunpack.c.l.b16 %v1228
    %v1432 = vunpack.c.h.b16 %v1228
    %v1433 = vunpack.c.l.b16 %v1229
    %v1434 = vunpack.c.h.b16 %v1229
    %v1435 = vunpack.c.l.b16 %v1230
    %v1436 = vunpack.c.h.b16 %v1230
    %v1437 = vunpack.c.l.b16 %v1231
    %v1438 = vunpack.c.h.b16 %v1231
    %v1439 = vunpack.c.l.b16 %v1232
    %v1440 = vunpack.c.h.b16 %v1232
    %v1441 = vunpack.c.l.b16 %v1233
    %v1442 = vunpack.c.h.b16 %v1233
    %v1443 = vunpack.c.l.b16 %v1234
    %v1444 = vunpack.c.h.b16 %v1234
    %v1445 = vpack.c.b16 %v1325, %v1317
    %v1446 = vpack.c.b16 %v1326, %v1318
    %v1447 = vpack.c.b16 %v1327, %v1319
    %v1448 = vpack.c.b16 %v1328, %v1320
    %v1449 = vpack.c.b16 %v1329, %v1321
    %v1450 = vpack.c.b16 %v1330, %v1322
    %v1451 = vpack.c.b16 %v1331, %v1323
    %v1452 = vpack.c.b16 %v1332, %v1324
    %v1453 = vpack.c.b16 %v1341, %v1333
    %v1454 = vpack.c.b16 %v1342, %v1334
    %v1455 = vpack.c.b16 %v1343, %v1335
    %v1456 = vpack.c.b16 %v1344, %v1336
    %v1457 = vpack.c.b16 %v1345, %v1337
    %v1458 = vpack.c.b16 %v1346, %v1338
    %v1459 = vpack.c.b16 %v1347, %v1339
    %v1460 = vpack.c.b16 %v1348, %v1340
    %v1461 = vpack.c.b16 %v1357, %v1349
    %v1462 = vpack.c.b16 %v1358, %v1350
    %v1463 = vpack.c.b16 %v1359, %v1351
    %v1464 = vpack.c.b16 %v1360, %v1352
    %v1465 = vpack.c.b16 %v1361, %v1353
    %v1466 = vpack.c.b16 %v1362, %v1354
    %v1467 = vpack.c.b16 %v1363, %v1355
    %v1468 = vpack.c.b16 %v1364, %v1356
    %v1469 = vpack.c.b16 %v1373, %v1365
    %v1470 = vpack.c.b16 %v1374, %v1366
    %v1471 = vpack.c.b16 %v1375, %v1367
    %v1472 = vpack.c.b16 %v1376, %v1368
    %v1473 = vpack.c.b16 %v1377, %v1369
    %v1474 = vpack.c.b16 %v1378, %v1370
    %v1475 = vpack.c.b16 %v1379, %v1371
    %v1476 = vpack.c.b16 %v1380, %v1372
    %v1477 = vpack.c.b16 %v1389, %v1381
    %v1478 = vpack.c.b16 %v1390, %v1382
    %v1479 = vpack.c.b16 %v1391, %v1383
    %v1480 = vpack.c.b16 %v1392, %v1384
    %v1481 = vpack.c.b16 %v1393, %v1385
    %v1482 = vpack.c.b16 %v1394, %v1386
    %v1483 = vpack.c.b16 %v1395, %v1387
    %v1484 = vpack.c.b16 %v1396, %v1388
    %v1485 = vpack.c.b16 %v1405, %v1397
    %v1486 = vpack.c.b16 %v1406, %v1398
    %v1487 = vpack.c.b16 %v1407, %v1399
    %v1488 = vpack.c.b16 %v1408, %v1400
    %v1489 = vpack.c.b16 %v1409, %v1401
    %v1490 = vpack.c.b16 %v1410, %v1402
    %v1491 = vpack.c.b16 %v1411, %v1403
    %v1492 = vpack.c.b16 %v1412, %v1404
    %v1493 = vpack.c.b16 %v1421, %v1413
    %v1494 = vpack.c.b16 %v1422, %v1414
    %v1495 = vpack.c.b16 %v1423, %v1415
    %v1496 = vpack.c.b16 %v1424, %v1416
    %v1497 = vpack.c.b16 %v1425, %v1417
    %v1498 = vpack.c.b16 %v1426, %v1418
    %v1499 = vpack.c.b16 %v1427, %v1419
    %v1500 = vpack.c.b16 %v1428, %v1420
    %v1501 = vpack.c.b16 %v1437, %v1429
    %v1502 = vpack.c.b16 %v1438, %v1430
    %v1503 = vpack.c.b16 %v1439, %v1431
    %v1504 = vpack.c.b16 %v1440, %v1432
    %v1505 = vpack.c.b16 %v1441, %v1433
    %v1506 = vpack.c.b16 %v1442, %v1434
    %v1507 = vpack.c.b16 %v1443, %v1435
    %v1508 = vpack.c.b16 %v1444, %v1436
    %1573 = vmatpush.bf16.msra.mxu0 %v1501
    %1574 = vmatpush.bf16.msra.mxu0 %v1493
    %1575 = vmatpush.bf16.msra.mxu0 %v1485
    %1576 = vmatpush.bf16.msra.mxu0 %v1477
    %1577 = vmatpush.bf16.msra.mxu0 %v1469
    %1578 = vmatpush.bf16.msra.mxu0 %v1461
    %1579 = vmatpush.bf16.msra.mxu0 %v1453
    %1580 = vmatpush.bf16.msra.mxu0 %v1445
    %1581 = vmatmul.bf16.gmra.mxu0 %v1170
    %v1582 = vpop.f32.mrf.mxu0
    %v1583 = vadd.f32 %v1237, %v1582
    %v1584 = vpop.f32.mrf.mxu0
    %v1585 = vadd.f32 %v1237, %v1584
    %1586 = vdwg.mxu0
    %1587 = vmatpush.bf16.msra.mxu0 %v1502
    %1588 = vmatpush.bf16.msra.mxu0 %v1494
    %1589 = vmatpush.bf16.msra.mxu0 %v1486
    %1590 = vmatpush.bf16.msra.mxu0 %v1478
    %1591 = vmatpush.bf16.msra.mxu0 %v1470
    %1592 = vmatpush.bf16.msra.mxu0 %v1462
    %1593 = vmatpush.bf16.msra.mxu0 %v1454
    %1594 = vmatpush.bf16.msra.mxu0 %v1446
    %1595 = vmatmul.bf16.gmra.mxu0 %v1170
    %v1596 = vpop.f32.mrf.mxu0
    %v1597 = vadd.f32 %v1238, %v1596
    %v1598 = vpop.f32.mrf.mxu0
    %v1599 = vadd.f32 %v1238, %v1598
    %1600 = vdwg.mxu0
    %1601 = vmatpush.bf16.msra.mxu0 %v1503
    %1602 = vmatpush.bf16.msra.mxu0 %v1495
    %1603 = vmatpush.bf16.msra.mxu0 %v1487
    %1604 = vmatpush.bf16.msra.mxu0 %v1479
    %1605 = vmatpush.bf16.msra.mxu0 %v1471
    %1606 = vmatpush.bf16.msra.mxu0 %v1463
    %1607 = vmatpush.bf16.msra.mxu0 %v1455
    %1608 = vmatpush.bf16.msra.mxu0 %v1447
    %1609 = vmatmul.bf16.gmra.mxu0 %v1170
    %v1610 = vpop.f32.mrf.mxu0
    %v1611 = vadd.f32 %v1239, %v1610
    %v1612 = vpop.f32.mrf.mxu0
    %v1613 = vadd.f32 %v1239, %v1612
    %1614 = vdwg.mxu0
    %1615 = vmatpush.bf16.msra.mxu0 %v1504
    %1616 = vmatpush.bf16.msra.mxu0 %v1496
    %1617 = vmatpush.bf16.msra.mxu0 %v1488
    %1618 = vmatpush.bf16.msra.mxu0 %v1480
    %1619 = vmatpush.bf16.msra.mxu0 %v1472
    %1620 = vmatpush.bf16.msra.mxu0 %v1464
    %1621 = vmatpush.bf16.msra.mxu0 %v1456
    %1622 = vmatpush.bf16.msra.mxu0 %v1448
    %1623 = vmatmul.bf16.gmra.mxu0 %v1170
    %v1624 = vpop.f32.mrf.mxu0
    %v1625 = vadd.f32 %v1240, %v1624
    %v1626 = vpop.f32.mrf.mxu0
    %v1627 = vadd.f32 %v1240, %v1626
    %1628 = vdwg.mxu0
    %1629 = vmatpush.bf16.msra.mxu0 %v1505
    %1630 = vmatpush.bf16.msra.mxu0 %v1497
    %1631 = vmatpush.bf16.msra.mxu0 %v1489
    %1632 = vmatpush.bf16.msra.mxu0 %v1481
    %1633 = vmatpush.bf16.msra.mxu0 %v1473
    %1634 = vmatpush.bf16.msra.mxu0 %v1465
    %1635 = vmatpush.bf16.msra.mxu0 %v1457
    %1636 = vmatpush.bf16.msra.mxu0 %v1449
    %1637 = vmatmul.bf16.gmra.mxu0 %v1170
    %v1638 = vpop.f32.mrf.mxu0
    %v1639 = vadd.f32 %v1241, %v1638
    %v1640 = vpop.f32.mrf.mxu0
    %v1641 = vadd.f32 %v1241, %v1640
    %1642 = vdwg.mxu0
    %1643 = vmatpush.bf16.msra.mxu0 %v1506
    %1644 = vmatpush.bf16.msra.mxu0 %v1498
    %1645 = vmatpush.bf16.msra.mxu0 %v1490
    %1646 = vmatpush.bf16.msra.mxu0 %v1482
    %1647 = vmatpush.bf16.msra.mxu0 %v1474
    %1648 = vmatpush.bf16.msra.mxu0 %v1466
    %1649 = vmatpush.bf16.msra.mxu0 %v1458
    %1650 = vmatpush.bf16.msra.mxu0 %v1450
    %1651 = vmatmul.bf16.gmra.mxu0 %v1170
    %v1652 = vpop.f32.mrf.mxu0
    %v1653 = vadd.f32 %v1242, %v1652
    %v1654 = vpop.f32.mrf.mxu0
    %v1655 = vadd.f32 %v1242, %v1654
    %1656 = vdwg.mxu0
    %1657 = vmatpush.bf16.msra.mxu0 %v1507
    %1658 = vmatpush.bf16.msra.mxu0 %v1499
    %1659 = vmatpush.bf16.msra.mxu0 %v1491
    %1660 = vmatpush.bf16.msra.mxu0 %v1483
    %1661 = vmatpush.bf16.msra.mxu0 %v1475
    %1662 = vmatpush.bf16.msra.mxu0 %v1467
    %1663 = vmatpush.bf16.msra.mxu0 %v1459
    %1664 = vmatpush.bf16.msra.mxu0 %v1451
    %1665 = vmatmul.bf16.gmra.mxu0 %v1170
    %v1666 = vpop.f32.mrf.mxu0
    %v1667 = vadd.f32 %v1243, %v1666
    %v1668 = vpop.f32.mrf.mxu0
    %v1669 = vadd.f32 %v1243, %v1668
    %1670 = vdwg.mxu0
    %1671 = vmatpush.bf16.msra.mxu0 %v1508
    %1672 = vmatpush.bf16.msra.mxu0 %v1500
    %1673 = vmatpush.bf16.msra.mxu0 %v1492
    %1674 = vmatpush.bf16.msra.mxu0 %v1484
    %1675 = vmatpush.bf16.msra.mxu0 %v1476
    %1676 = vmatpush.bf16.msra.mxu0 %v1468
    %1677 = vmatpush.bf16.msra.mxu0 %v1460
    %1678 = vmatpush.bf16.msra.mxu0 %v1452
    %1679 = vmatmul.bf16.gmra.mxu0 %v1170
    %v1680 = vpop.f32.mrf.mxu0
    %v1681 = vadd.f32 %v1244, %v1680
    %v1682 = vpop.f32.mrf.mxu0
    %v1683 = vadd.f32 %v1244, %v1682
    %1684 = vdwg.mxu0
    %v1685 = vmax.f32 %v1583, 0.0
    %v1686 = vmax.f32 %v1597, 0.0
    %v1687 = vmax.f32 %v1611, 0.0
    %v1688 = vmax.f32 %v1625, 0.0
    %v1689 = vmax.f32 %v1639, 0.0
    %v1690 = vmax.f32 %v1653, 0.0
    %v1691 = vmax.f32 %v1667, 0.0
    %v1692 = vmax.f32 %v1681, 0.0
    %v1693 = vmax.f32 %v1585, 0.0
    %v1694 = vmax.f32 %v1599, 0.0
    %v1695 = vmax.f32 %v1613, 0.0
    %v1696 = vmax.f32 %v1627, 0.0
    %v1697 = vmax.f32 %v1641, 0.0
    %v1698 = vmax.f32 %v1655, 0.0
    %v1699 = vmax.f32 %v1669, 0.0
    %v1700 = vmax.f32 %v1683, 0.0
    %v1701 = vmax.f32 %v1685, %v1693
    %v1702 = vrot.slane %v1701, 4
    %v1703 = vmax.f32 %v1701, %v1702
    %v1704 = vrot.slane %v1703, 2
    %v1705 = vmax.f32 %v1703, %v1704
    %v1706 = vrot.slane %v1705, 1
    %v1707 = vmax.f32 %v1705, %v1706
    %v1708 = vmax.f32 %v1686, %v1694
    %v1709 = vrot.slane %v1708, 4
    %v1710 = vmax.f32 %v1708, %v1709
    %v1711 = vrot.slane %v1710, 2
    %v1712 = vmax.f32 %v1710, %v1711
    %v1713 = vrot.slane %v1712, 1
    %v1714 = vmax.f32 %v1712, %v1713
    %v1715 = vmax.f32 %v1687, %v1695
    %v1716 = vrot.slane %v1715, 4
    %v1717 = vmax.f32 %v1715, %v1716
    %v1718 = vrot.slane %v1717, 2
    %v1719 = vmax.f32 %v1717, %v1718
    %v1720 = vrot.slane %v1719, 1
    %v1721 = vmax.f32 %v1719, %v1720
    %v1722 = vmax.f32 %v1688, %v1696
    %v1723 = vrot.slane %v1722, 4
    %v1724 = vmax.f32 %v1722, %v1723
    %v1725 = vrot.slane %v1724, 2
    %v1726 = vmax.f32 %v1724, %v1725
    %v1727 = vrot.slane %v1726, 1
    %v1728 = vmax.f32 %v1726, %v1727
    %v1729 = vmax.f32 %v1689, %v1697
    %v1730 = vrot.slane %v1729, 4
    %v1731 = vmax.f32 %v1729, %v1730
    %v1732 = vrot.slane %v1731, 2
    %v1733 = vmax.f32 %v1731, %v1732
    %v1734 = vrot.slane %v1733, 1
    %v1735 = vmax.f32 %v1733, %v1734
    %v1736 = vmax.f32 %v1690, %v1698
    %v1737 = vrot.slane %v1736, 4
    %v1738 = vmax.f32 %v1736, %v1737
    %v1739 = vrot.slane %v1738, 2
    %v1740 = vmax.f32 %v1738, %v1739
    %v1741 = vrot.slane %v1740, 1
    %v1742 = vmax.f32 %v1740, %v1741
    %v1743 = vmax.f32 %v1691, %v1699
    %v1744 = vrot.slane %v1743, 4
    %v1745 = vmax.f32 %v1743, %v1744
    %v1746 = vrot.slane %v1745, 2
    %v1747 = vmax.f32 %v1745, %v1746
    %v1748 = vrot.slane %v1747, 1
    %v1749 = vmax.f32 %v1747, %v1748
    %v1750 = vmax.f32 %v1692, %v1700
    %v1751 = vrot.slane %v1750, 4
    %v1752 = vmax.f32 %v1750, %v1751
    %v1753 = vrot.slane %v1752, 2
    %v1754 = vmax.f32 %v1752, %v1753
    %v1755 = vrot.slane %v1754, 1
    %v1756 = vmax.f32 %v1754, %v1755
    %s1757 = scalar_lea.vmem [#allocation2], 1
    %v1758 = vld [vmem:[%s1757] ss:$2 sm:$0xff]
    %v1767 = vrot.slane %v1714, 7
    %v1768 = vrot.slane %v1721, 6
    %v1769 = vrot.slane %v1728, 5
    %v1770 = vrot.slane %v1735, 4
    %v1771 = vrot.slane %v1742, 3
    %v1772 = vrot.slane %v1749, 2
    %v1773 = vrot.slane %v1756, 1
    %v1774 = vsel %vm942, %v1707, %v1767
    %v1775 = vsel %vm944, %v1768, %v1769
    %v1776 = vsel %vm946, %v1774, %v1775
    %v1777 = vsel %vm948, %v1770, %v1771
    %v1778 = vsel %vm950, %v1772, %v1773
    %v1779 = vsel %vm952, %v1777, %v1778
    %v1780 = vsel %vm954, %v1776, %v1779
    %v1782 = vmax.f32 %v1758, %v1780
    %1783 = vst [vmem:[%s1757] ss:$2 sm:$0xff] %v1782
    // Predicated region
    $region70: #{tpu_custom_call.1} parent=1 // pred_check
      %p1784 = pneg %p114
    $region71: #{tpu_custom_call.1} parent=1 // pred_check_branch
      %1786 = sbr.rel (%p1784) target = $region73
    $region72: #{tpu_custom_call.1} parent=1 // pred_region
      %v1787 = vld [vmem:[#allocation2] sm:$0xff]
      %v1788 = vld [vmem:[#allocation2 + $0x8] sm:$0xff]
      %1789 = vst [vmem:[#allocation12] sm:$0xff] %v1787
      %1790 = vst [vmem:[#allocation12 + $0x8] sm:$0xff] %v1788
    $region73: #{tpu_custom_call.1} parent=1 // pred_fallthru
      _
    // Predicated region
    $region74: #{tpu_custom_call.1} parent=1 // pred_check
      _
    $region75: #{tpu_custom_call.1} parent=1 // pred_check_branch
      %1792 = sbr.rel (0) target = $region77
    $region76: #{tpu_custom_call.1} parent=1 // pred_region
      %1794 = vsyncadd [#allocation5], 0
      %s1796 = sshll.u32 [#allocation12], 4
      %s1797 = int_to_ptr.vmem [resolvable:$true] %s1796
      %s1798 = sshll.u32 %s11, 4
      %s1799 = int_to_ptr.hbm [resolvable:$true] %s1798
      %1801 = dma.vmem_to_hbm [thread:$0]  %s1797, 256, %s1799, [#allocation5]
    $region77: #{tpu_custom_call.1} parent=1 // pred_fallthru
      _
    // Predicated region
    $region78: #{tpu_custom_call.1} parent=1 // pred_check
      _
    $region79: #{tpu_custom_call.1} parent=1 // pred_check_branch
      %1803 = sbr.rel (0) target = $region81
    $region80: #{tpu_custom_call.1} parent=1 // pred_region
      %1805 = dma.done [#allocation5], 256
    $region81: #{tpu_custom_call.1} parent=1 // pred_fallthru
      _
    %1806 = vsyncpa [#allocation4], 1
    %1807 = vsyncpa [#allocation7], 1
    %1808 = vsyncpa [#allocation10], 1
    %1809 = vsyncpa [#allocation5], 1

</llo_original>
